<compile_context>
chip_gen: v7x
topology: tpu7x:2x2x1
jax: 0.10.0
libtpu: 0.0.40
codegen_flags: <defaults>
</compile_context>

<pallas_src>
import functools
import math

import jax
import jax.numpy as jnp
import numpy as np
from jax import lax
from jax.experimental import pallas as pl
from jax.experimental.pallas import tpu as pltpu


# ---------------------------------------------------------------------------
# Fused Pallas kernel: whole forward in one invocation (no grid)
# ---------------------------------------------------------------------------

def _fused_mha_kernel(q_in_ref, k_in_ref, v_in_ref,
                      wq_ref, wk_ref, wv_ref, wp_ref,
                      bq_ref, bk_ref, bv_ref, bp_ref,
                      o_ref, ctx_ref,
                      *, num_heads, batch, nq, nk):
    # q_in: (B*Nq, C); k_in/v_in: (B*Nk, C); weights pre-transposed to (Cin, Cout);
    # biases (1, C).  wq/bq already carry the 1/sqrt(head_dim) scale.
    # All compute in f32.

    # Q/K/V projections on the full batch-folded slabs (one matmul each).
    q = jnp.dot(q_in_ref[...], wq_ref[...],
                preferred_element_type=jnp.float32) + bq_ref[...]
    k = jnp.dot(k_in_ref[...], wk_ref[...],
                preferred_element_type=jnp.float32) + bk_ref[...]
    v = jnp.dot(v_in_ref[...], wv_ref[...],
                preferred_element_type=jnp.float32) + bv_ref[...]

    c = q.shape[-1]
    hd = c // num_heads
    # A @ B^T without materializing a transpose: contract last dims of both.
    dn_nt = (((1,), (1,)), ((), ()))

    # Static unroll over (batch, head).  Heads live in lane sub-slices of the
    # projected slabs; each head's context goes straight into its lane slice of
    # the (B*Nq, C) VMEM scratch, so heads are never concatenated / transposed.
    for b in range(batch):
        qr = slice(b * nq, (b + 1) * nq)        # query rows of this batch elem
        kr = slice(b * nk, (b + 1) * nk)        # key/value rows
        for h in range(num_heads):
            ln = slice(h * hd, (h + 1) * hd)    # lane slice of this head
            qh = q[qr, ln]                      # (Nq, hd)  (already scaled)
            kh = k[kr, ln]                      # (Nk, hd)
            vh = v[kr, ln]                      # (Nk, hd)
            s = lax.dot_general(qh, kh, dn_nt,
                                preferred_element_type=jnp.float32)   # (Nq, Nk)
            m = jnp.max(s, axis=-1, keepdims=True)
            p = jnp.exp(s - m)
            p = p / jnp.sum(p, axis=-1, keepdims=True)   # softmax over keys
            # attn_drop(p=0.0) is identity.
            ctx_ref[qr, ln] = jnp.dot(p, vh,
                                      preferred_element_type=jnp.float32)

    # ONE output projection over the merged heads (contraction dim = C).
    out = jnp.dot(ctx_ref[...], wp_ref[...],
                  preferred_element_type=jnp.float32) + bp_ref[...]
    # proj_drop(p=0.0) is identity.
    o_ref[...] = out.astype(o_ref.dtype)


# ---------------------------------------------------------------------------
# MultiheadAttention forward (wrapper)
# ---------------------------------------------------------------------------

def multihead_attention_forward(params, query, key, value, num_heads,
                                batch_first=False):
    """Reproduces MultiheadAttention.forward (dense path, no mask, eval mode).

    query/key/value: (T, B, C) if batch_first=False (module default), else (B, T, C).
    Returns (x, None) with x in the same layout as the input.
    """
    if not batch_first:
        query = jnp.transpose(query, (1, 0, 2))
        key = jnp.transpose(key, (1, 0, 2))
        value = jnp.transpose(value, (1, 0, 2))

    B, Nq, C = query.shape
    _, Nk, _ = key.shape
    assert C % num_heads == 0
    hd = C // num_heads
    scale = 1.0 / math.sqrt(hd)

    # Pre-transpose torch-convention (Cout, Cin) weights to (Cin, Cout) once in
    # the wrapper (would be stored this way in production) and fold the
    # 1/sqrt(head_dim) query scale into Wq^T / bq so the kernel never pays a
    # transpose or an extra (N, C) multiply.
    wq_t = params["q_w"].T * scale
    wk_t = params["k_w"].T
    wv_t = params["v_w"].T
    wp_t = params["proj_w"].T
    bq = (params["q_b"] * scale).reshape(1, C)
    bk = params["k_b"].reshape(1, C)
    bv = params["v_b"].reshape(1, C)
    bp = params["proj_b"].reshape(1, C)

    # Fold the batch into the row dimension: one kernel invocation, one
    # projection matmul per Q/K/V over all batch elements.
    q2 = query.reshape(B * Nq, C)
    k2 = key.reshape(B * Nk, C)
    v2 = value.reshape(B * Nk, C)

    kernel = functools.partial(_fused_mha_kernel, num_heads=num_heads,
                               batch=B, nq=Nq, nk=Nk)

    # Advisory cost estimate (projections + attention + output projection).
    flops = (2 * B * Nq * C * C               # Q projection
             + 2 * 2 * B * Nk * C * C         # K, V projections
             + 2 * 2 * B * num_heads * Nq * Nk * hd   # q@k^T and p@v
             + 2 * B * Nq * C * C)            # output projection
    transcendentals = B * num_heads * Nq * Nk          # exp in softmax
    bytes_accessed = 4 * (B * Nq * C + 2 * B * Nk * C  # inputs
                          + 4 * C * C + 4 * C          # weights + biases
                          + B * Nq * C)                # output

    vmem_spec = pl.BlockSpec(memory_space=pltpu.MemorySpace.VMEM)

    out2 = pl.pallas_call(
        kernel,
        out_shape=jax.ShapeDtypeStruct((B * Nq, C), query.dtype),
        in_specs=[vmem_spec] * 11,
        out_specs=vmem_spec,
        scratch_shapes=[pltpu.VMEM((B * Nq, C), jnp.float32)],
        cost_estimate=pl.CostEstimate(flops=flops,
                                      transcendentals=transcendentals,
                                      bytes_accessed=bytes_accessed),
    )(q2, k2, v2, wq_t, wk_t, wv_t, wp_t, bq, bk, bv, bp)

    out = out2.reshape(B, Nq, C)
    if not batch_first:
        out = jnp.transpose(out, (1, 0, 2))
    return out, None


# ---------------------------------------------------------------------------
# Pure-JAX reference (for correctness check)
# ---------------------------------------------------------------------------

def reference_forward(params, query, key, value, num_heads, batch_first=False):
    if not batch_first:
        query = jnp.transpose(query, (1, 0, 2))
        key = jnp.transpose(key, (1, 0, 2))
        value = jnp.transpose(value, (1, 0, 2))
    B, Nq, C = query.shape
    _, Nk, _ = key.shape
    H, hd = num_heads, C // num_heads

    def lin(x, w, b):
        return x @ w.T + b

    q = lin(query, params["q_w"], params["q_b"]).reshape(B, Nq, H, hd).transpose(0, 2, 1, 3)
    k = lin(key, params["k_w"], params["k_b"]).reshape(B, Nk, H, hd).transpose(0, 2, 1, 3)
    v = lin(value, params["v_w"], params["v_b"]).reshape(B, Nk, H, hd).transpose(0, 2, 1, 3)
    q = q / math.sqrt(hd)
    att = jax.nn.softmax(q @ jnp.swapaxes(k, -2, -1), axis=-1)
    x = att @ v                                               # (B, H, Nq, hd)
    x = x.transpose(0, 2, 1, 3).reshape(B, Nq, C)
    x = lin(x, params["proj_w"], params["proj_b"])
    if not batch_first:
        x = jnp.transpose(x, (1, 0, 2))
    return x


# ---------------------------------------------------------------------------
# Main
# ---------------------------------------------------------------------------

if __name__ == "__main__":
    # Module config: MultiheadAttention(embed_dim=32, num_heads=4, dropout=0.0,
    #                                   auto_sparsity=0)  (dense attention path)
    embed_dim = 32
    num_heads = 4
    seq = 8
    batch = 2

    key0 = jax.random.PRNGKey(0)
    keys = jax.random.split(key0, 12)

    def init_linear(kw, kb, out_f, in_f):
        # Deterministic nn.Linear-style init (uniform +- 1/sqrt(in_f)).
        bound = 1.0 / math.sqrt(in_f)
        w = jax.random.uniform(kw, (out_f, in_f), jnp.float32, -bound, bound)
        b = jax.random.uniform(kb, (out_f,), jnp.float32, -bound, bound)
        return w, b

    params = {}
    params["q_w"], params["q_b"] = init_linear(keys[0], keys[1], embed_dim, embed_dim)
    params["k_w"], params["k_b"] = init_linear(keys[2], keys[3], embed_dim, embed_dim)
    params["v_w"], params["v_b"] = init_linear(keys[4], keys[5], embed_dim, embed_dim)
    params["proj_w"], params["proj_b"] = init_linear(keys[6], keys[7], embed_dim, embed_dim)

    # Inputs in (T, B, C) layout (batch_first=False, the module default).
    query = jax.random.normal(keys[8], (seq, batch, embed_dim), jnp.float32)
    key_in = jax.random.normal(keys[9], (seq, batch, embed_dim), jnp.float32)
    value = jax.random.normal(keys[10], (seq, batch, embed_dim), jnp.float32)

    out, attn_w = multihead_attention_forward(params, query, key_in, value,
                                              num_heads, batch_first=False)
    out = jax.block_until_ready(out)
    assert attn_w is None
    assert out.shape == (seq, batch, embed_dim)

    ref = reference_forward(params, query, key_in, value, num_heads,
                            batch_first=False)
    # Tolerance covers MXU default-precision f32 matmul passes in the two
    # implementations (the approximate reciprocal is gone).
    np.testing.assert_allclose(np.asarray(out), np.asarray(ref),
                               rtol=2e-3, atol=2e-3)

    print("KERNEL_OK")
</pallas_src>

<mosaic_0001>
module attributes {stable_mosaic.version = 11 : i64} {
  func.func @_fused_mha_kernel(%arg0: memref<16x32xf32, #tpu.memory_space<vmem>>, %arg1: memref<16x32xf32, #tpu.memory_space<vmem>>, %arg2: memref<16x32xf32, #tpu.memory_space<vmem>>, %arg3: memref<32x32xf32, #tpu.memory_space<vmem>>, %arg4: memref<32x32xf32, #tpu.memory_space<vmem>>, %arg5: memref<32x32xf32, #tpu.memory_space<vmem>>, %arg6: memref<32x32xf32, #tpu.memory_space<vmem>>, %arg7: memref<1x32xf32, #tpu.memory_space<vmem>>, %arg8: memref<1x32xf32, #tpu.memory_space<vmem>>, %arg9: memref<1x32xf32, #tpu.memory_space<vmem>>, %arg10: memref<1x32xf32, #tpu.memory_space<vmem>>, %arg11: memref<16x32xf32, #tpu.memory_space<vmem>>, %arg12: memref<16x32xf32, #tpu.memory_space<vmem>>) attributes {dimension_semantics = [], scalar_prefetch = 0 : i64, scratch_operands = 1 : i64, tpu.core_type = #tpu.core_type<tc>} {
    %c0 = arith.constant 0 : index
    %c0_0 = arith.constant 0 : index
    %0 = vector.load %arg0[%c0, %c0_0] : memref<16x32xf32, #tpu.memory_space<vmem>>, vector<16x32xf32>
    %c0_1 = arith.constant 0 : index
    %c0_2 = arith.constant 0 : index
    %1 = vector.load %arg3[%c0_1, %c0_2] : memref<32x32xf32, #tpu.memory_space<vmem>>, vector<32x32xf32>
    %cst = arith.constant dense<0.000000e+00> : vector<16x32xf32>
    %2 = tpu.matmul %0, %1, %cst {dimension_numbers = #tpu.dot_dimension_numbers<[1], [0], [0], [1], [0, 0, 1, 1], [], []>} : vector<16x32xf32>, vector<32x32xf32>, vector<16x32xf32> -> vector<16x32xf32>
    %c0_3 = arith.constant 0 : index
    %c0_4 = arith.constant 0 : index
    %3 = vector.load %arg7[%c0_3, %c0_4] : memref<1x32xf32, #tpu.memory_space<vmem>>, vector<1x32xf32>
    %4 = vector.broadcast %3 : vector<1x32xf32> to vector<16x32xf32>
    %5 = arith.addf %2, %4 : vector<16x32xf32>
    %c0_5 = arith.constant 0 : index
    %c0_6 = arith.constant 0 : index
    %6 = vector.load %arg1[%c0_5, %c0_6] : memref<16x32xf32, #tpu.memory_space<vmem>>, vector<16x32xf32>
    %c0_7 = arith.constant 0 : index
    %c0_8 = arith.constant 0 : index
    %7 = vector.load %arg4[%c0_7, %c0_8] : memref<32x32xf32, #tpu.memory_space<vmem>>, vector<32x32xf32>
    %cst_9 = arith.constant dense<0.000000e+00> : vector<16x32xf32>
    %8 = tpu.matmul %6, %7, %cst_9 {dimension_numbers = #tpu.dot_dimension_numbers<[1], [0], [0], [1], [0, 0, 1, 1], [], []>} : vector<16x32xf32>, vector<32x32xf32>, vector<16x32xf32> -> vector<16x32xf32>
    %c0_10 = arith.constant 0 : index
    %c0_11 = arith.constant 0 : index
    %9 = vector.load %arg8[%c0_10, %c0_11] : memref<1x32xf32, #tpu.memory_space<vmem>>, vector<1x32xf32>
    %10 = vector.broadcast %9 : vector<1x32xf32> to vector<16x32xf32>
    %11 = arith.addf %8, %10 : vector<16x32xf32>
    %c0_12 = arith.constant 0 : index
    %c0_13 = arith.constant 0 : index
    %12 = vector.load %arg2[%c0_12, %c0_13] : memref<16x32xf32, #tpu.memory_space<vmem>>, vector<16x32xf32>
    %c0_14 = arith.constant 0 : index
    %c0_15 = arith.constant 0 : index
    %13 = vector.load %arg5[%c0_14, %c0_15] : memref<32x32xf32, #tpu.memory_space<vmem>>, vector<32x32xf32>
    %cst_16 = arith.constant dense<0.000000e+00> : vector<16x32xf32>
    %14 = tpu.matmul %12, %13, %cst_16 {dimension_numbers = #tpu.dot_dimension_numbers<[1], [0], [0], [1], [0, 0, 1, 1], [], []>} : vector<16x32xf32>, vector<32x32xf32>, vector<16x32xf32> -> vector<16x32xf32>
    %c0_17 = arith.constant 0 : index
    %c0_18 = arith.constant 0 : index
    %15 = vector.load %arg9[%c0_17, %c0_18] : memref<1x32xf32, #tpu.memory_space<vmem>>, vector<1x32xf32>
    %16 = vector.broadcast %15 : vector<1x32xf32> to vector<16x32xf32>
    %17 = arith.addf %14, %16 : vector<16x32xf32>
    %18 = vector.extract_strided_slice %5 {offsets = [0, 0], sizes = [8, 8], strides = [1, 1]} : vector<16x32xf32> to vector<8x8xf32>
    %19 = vector.extract_strided_slice %11 {offsets = [0, 0], sizes = [8, 8], strides = [1, 1]} : vector<16x32xf32> to vector<8x8xf32>
    %20 = vector.extract_strided_slice %17 {offsets = [0, 0], sizes = [8, 8], strides = [1, 1]} : vector<16x32xf32> to vector<8x8xf32>
    %cst_19 = arith.constant dense<0.000000e+00> : vector<8x8xf32>
    %21 = tpu.matmul %18, %19, %cst_19 {dimension_numbers = #tpu.dot_dimension_numbers<[1], [1], [0], [0], [0, 0, 1, 0], [], []>} : vector<8x8xf32>, vector<8x8xf32>, vector<8x8xf32> -> vector<8x8xf32>
    %cst_20 = arith.constant dense<0xFF800000> : vector<8xf32>
    %22 = vector.multi_reduction <maximumf>, %21, %cst_20 [1] : vector<8x8xf32> to vector<8xf32>
    %23 = vector.shape_cast %22 : vector<8xf32> to vector<8x1xf32>
    %24 = vector.broadcast %23 : vector<8x1xf32> to vector<8x8xf32>
    %25 = arith.subf %21, %24 : vector<8x8xf32>
    %26 = math.exp %25 : vector<8x8xf32>
    %cst_21 = arith.constant dense<0.000000e+00> : vector<8xf32>
    %27 = vector.multi_reduction <add>, %26, %cst_21 [1] : vector<8x8xf32> to vector<8xf32>
    %28 = vector.shape_cast %27 : vector<8xf32> to vector<8x1xf32>
    %29 = vector.broadcast %28 : vector<8x1xf32> to vector<8x8xf32>
    %30 = arith.divf %26, %29 : vector<8x8xf32>
    %cst_22 = arith.constant dense<0.000000e+00> : vector<8x8xf32>
    %31 = tpu.matmul %30, %20, %cst_22 {dimension_numbers = #tpu.dot_dimension_numbers<[1], [0], [0], [1], [0, 0, 1, 1], [], []>} : vector<8x8xf32>, vector<8x8xf32>, vector<8x8xf32> -> vector<8x8xf32>
    %c0_23 = arith.constant 0 : index
    %c0_24 = arith.constant 0 : index
    %32 = vector.load %arg12[%c0_23, %c0_24] : memref<16x32xf32, #tpu.memory_space<vmem>>, vector<8x8xf32>
    tpu.vector_store %arg12[%c0_23, %c0_24], %31 {strides = array<i32>} : memref<16x32xf32, #tpu.memory_space<vmem>>, vector<8x8xf32>,
    %33 = vector.extract_strided_slice %5 {offsets = [0, 8], sizes = [8, 8], strides = [1, 1]} : vector<16x32xf32> to vector<8x8xf32>
    %34 = vector.extract_strided_slice %11 {offsets = [0, 8], sizes = [8, 8], strides = [1, 1]} : vector<16x32xf32> to vector<8x8xf32>
    %35 = vector.extract_strided_slice %17 {offsets = [0, 8], sizes = [8, 8], strides = [1, 1]} : vector<16x32xf32> to vector<8x8xf32>
    %cst_25 = arith.constant dense<0.000000e+00> : vector<8x8xf32>
    %36 = tpu.matmul %33, %34, %cst_25 {dimension_numbers = #tpu.dot_dimension_numbers<[1], [1], [0], [0], [0, 0, 1, 0], [], []>} : vector<8x8xf32>, vector<8x8xf32>, vector<8x8xf32> -> vector<8x8xf32>
    %cst_26 = arith.constant dense<0xFF800000> : vector<8xf32>
    %37 = vector.multi_reduction <maximumf>, %36, %cst_26 [1] : vector<8x8xf32> to vector<8xf32>
    %38 = vector.shape_cast %37 : vector<8xf32> to vector<8x1xf32>
    %39 = vector.broadcast %38 : vector<8x1xf32> to vector<8x8xf32>
    %40 = arith.subf %36, %39 : vector<8x8xf32>
    %41 = math.exp %40 : vector<8x8xf32>
    %cst_27 = arith.constant dense<0.000000e+00> : vector<8xf32>
    %42 = vector.multi_reduction <add>, %41, %cst_27 [1] : vector<8x8xf32> to vector<8xf32>
    %43 = vector.shape_cast %42 : vector<8xf32> to vector<8x1xf32>
    %44 = vector.broadcast %43 : vector<8x1xf32> to vector<8x8xf32>
    %45 = arith.divf %41, %44 : vector<8x8xf32>
    %cst_28 = arith.constant dense<0.000000e+00> : vector<8x8xf32>
    %46 = tpu.matmul %45, %35, %cst_28 {dimension_numbers = #tpu.dot_dimension_numbers<[1], [0], [0], [1], [0, 0, 1, 1], [], []>} : vector<8x8xf32>, vector<8x8xf32>, vector<8x8xf32> -> vector<8x8xf32>
    %c0_29 = arith.constant 0 : index
    %c8 = arith.constant 8 : index
    %47 = vector.load %arg12[%c0_29, %c8] : memref<16x32xf32, #tpu.memory_space<vmem>>, vector<8x8xf32>
    tpu.vector_store %arg12[%c0_29, %c8], %46 {strides = array<i32>} : memref<16x32xf32, #tpu.memory_space<vmem>>, vector<8x8xf32>,
    %48 = vector.extract_strided_slice %5 {offsets = [0, 16], sizes = [8, 8], strides = [1, 1]} : vector<16x32xf32> to vector<8x8xf32>
    %49 = vector.extract_strided_slice %11 {offsets = [0, 16], sizes = [8, 8], strides = [1, 1]} : vector<16x32xf32> to vector<8x8xf32>
    %50 = vector.extract_strided_slice %17 {offsets = [0, 16], sizes = [8, 8], strides = [1, 1]} : vector<16x32xf32> to vector<8x8xf32>
    %cst_30 = arith.constant dense<0.000000e+00> : vector<8x8xf32>
    %51 = tpu.matmul %48, %49, %cst_30 {dimension_numbers = #tpu.dot_dimension_numbers<[1], [1], [0], [0], [0, 0, 1, 0], [], []>} : vector<8x8xf32>, vector<8x8xf32>, vector<8x8xf32> -> vector<8x8xf32>
    %cst_31 = arith.constant dense<0xFF800000> : vector<8xf32>
    %52 = vector.multi_reduction <maximumf>, %51, %cst_31 [1] : vector<8x8xf32> to vector<8xf32>
    %53 = vector.shape_cast %52 : vector<8xf32> to vector<8x1xf32>
    %54 = vector.broadcast %53 : vector<8x1xf32> to vector<8x8xf32>
    %55 = arith.subf %51, %54 : vector<8x8xf32>
    %56 = math.exp %55 : vector<8x8xf32>
    %cst_32 = arith.constant dense<0.000000e+00> : vector<8xf32>
    %57 = vector.multi_reduction <add>, %56, %cst_32 [1] : vector<8x8xf32> to vector<8xf32>
    %58 = vector.shape_cast %57 : vector<8xf32> to vector<8x1xf32>
    %59 = vector.broadcast %58 : vector<8x1xf32> to vector<8x8xf32>
    %60 = arith.divf %56, %59 : vector<8x8xf32>
    %cst_33 = arith.constant dense<0.000000e+00> : vector<8x8xf32>
    %61 = tpu.matmul %60, %50, %cst_33 {dimension_numbers = #tpu.dot_dimension_numbers<[1], [0], [0], [1], [0, 0, 1, 1], [], []>} : vector<8x8xf32>, vector<8x8xf32>, vector<8x8xf32> -> vector<8x8xf32>
    %c0_34 = arith.constant 0 : index
    %c16 = arith.constant 16 : index
    %62 = vector.load %arg12[%c0_34, %c16] : memref<16x32xf32, #tpu.memory_space<vmem>>, vector<8x8xf32>
    tpu.vector_store %arg12[%c0_34, %c16], %61 {strides = array<i32>} : memref<16x32xf32, #tpu.memory_space<vmem>>, vector<8x8xf32>,
    %63 = vector.extract_strided_slice %5 {offsets = [0, 24], sizes = [8, 8], strides = [1, 1]} : vector<16x32xf32> to vector<8x8xf32>
    %64 = vector.extract_strided_slice %11 {offsets = [0, 24], sizes = [8, 8], strides = [1, 1]} : vector<16x32xf32> to vector<8x8xf32>
    %65 = vector.extract_strided_slice %17 {offsets = [0, 24], sizes = [8, 8], strides = [1, 1]} : vector<16x32xf32> to vector<8x8xf32>
    %cst_35 = arith.constant dense<0.000000e+00> : vector<8x8xf32>
    %66 = tpu.matmul %63, %64, %cst_35 {dimension_numbers = #tpu.dot_dimension_numbers<[1], [1], [0], [0], [0, 0, 1, 0], [], []>} : vector<8x8xf32>, vector<8x8xf32>, vector<8x8xf32> -> vector<8x8xf32>
    %cst_36 = arith.constant dense<0xFF800000> : vector<8xf32>
    %67 = vector.multi_reduction <maximumf>, %66, %cst_36 [1] : vector<8x8xf32> to vector<8xf32>
    %68 = vector.shape_cast %67 : vector<8xf32> to vector<8x1xf32>
    %69 = vector.broadcast %68 : vector<8x1xf32> to vector<8x8xf32>
    %70 = arith.subf %66, %69 : vector<8x8xf32>
    %71 = math.exp %70 : vector<8x8xf32>
    %cst_37 = arith.constant dense<0.000000e+00> : vector<8xf32>
    %72 = vector.multi_reduction <add>, %71, %cst_37 [1] : vector<8x8xf32> to vector<8xf32>
    %73 = vector.shape_cast %72 : vector<8xf32> to vector<8x1xf32>
    %74 = vector.broadcast %73 : vector<8x1xf32> to vector<8x8xf32>
    %75 = arith.divf %71, %74 : vector<8x8xf32>
    %cst_38 = arith.constant dense<0.000000e+00> : vector<8x8xf32>
    %76 = tpu.matmul %75, %65, %cst_38 {dimension_numbers = #tpu.dot_dimension_numbers<[1], [0], [0], [1], [0, 0, 1, 1], [], []>} : vector<8x8xf32>, vector<8x8xf32>, vector<8x8xf32> -> vector<8x8xf32>
    %c0_39 = arith.constant 0 : index
    %c24 = arith.constant 24 : index
    %77 = vector.load %arg12[%c0_39, %c24] : memref<16x32xf32, #tpu.memory_space<vmem>>, vector<8x8xf32>
    tpu.vector_store %arg12[%c0_39, %c24], %76 {strides = array<i32>} : memref<16x32xf32, #tpu.memory_space<vmem>>, vector<8x8xf32>,
    %78 = vector.extract_strided_slice %5 {offsets = [8, 0], sizes = [8, 8], strides = [1, 1]} : vector<16x32xf32> to vector<8x8xf32>
    %79 = vector.extract_strided_slice %11 {offsets = [8, 0], sizes = [8, 8], strides = [1, 1]} : vector<16x32xf32> to vector<8x8xf32>
    %80 = vector.extract_strided_slice %17 {offsets = [8, 0], sizes = [8, 8], strides = [1, 1]} : vector<16x32xf32> to vector<8x8xf32>
    %cst_40 = arith.constant dense<0.000000e+00> : vector<8x8xf32>
    %81 = tpu.matmul %78, %79, %cst_40 {dimension_numbers = #tpu.dot_dimension_numbers<[1], [1], [0], [0], [0, 0, 1, 0], [], []>} : vector<8x8xf32>, vector<8x8xf32>, vector<8x8xf32> -> vector<8x8xf32>
    %cst_41 = arith.constant dense<0xFF800000> : vector<8xf32>
    %82 = vector.multi_reduction <maximumf>, %81, %cst_41 [1] : vector<8x8xf32> to vector<8xf32>
    %83 = vector.shape_cast %82 : vector<8xf32> to vector<8x1xf32>
    %84 = vector.broadcast %83 : vector<8x1xf32> to vector<8x8xf32>
    %85 = arith.subf %81, %84 : vector<8x8xf32>
    %86 = math.exp %85 : vector<8x8xf32>
    %cst_42 = arith.constant dense<0.000000e+00> : vector<8xf32>
    %87 = vector.multi_reduction <add>, %86, %cst_42 [1] : vector<8x8xf32> to vector<8xf32>
    %88 = vector.shape_cast %87 : vector<8xf32> to vector<8x1xf32>
    %89 = vector.broadcast %88 : vector<8x1xf32> to vector<8x8xf32>
    %90 = arith.divf %86, %89 : vector<8x8xf32>
    %cst_43 = arith.constant dense<0.000000e+00> : vector<8x8xf32>
    %91 = tpu.matmul %90, %80, %cst_43 {dimension_numbers = #tpu.dot_dimension_numbers<[1], [0], [0], [1], [0, 0, 1, 1], [], []>} : vector<8x8xf32>, vector<8x8xf32>, vector<8x8xf32> -> vector<8x8xf32>
    %c8_44 = arith.constant 8 : index
    %c0_45 = arith.constant 0 : index
    %92 = vector.load %arg12[%c8_44, %c0_45] : memref<16x32xf32, #tpu.memory_space<vmem>>, vector<8x8xf32>
    tpu.vector_store %arg12[%c8_44, %c0_45], %91 {strides = array<i32>} : memref<16x32xf32, #tpu.memory_space<vmem>>, vector<8x8xf32>,
    %93 = vector.extract_strided_slice %5 {offsets = [8, 8], sizes = [8, 8], strides = [1, 1]} : vector<16x32xf32> to vector<8x8xf32>
    %94 = vector.extract_strided_slice %11 {offsets = [8, 8], sizes = [8, 8], strides = [1, 1]} : vector<16x32xf32> to vector<8x8xf32>
    %95 = vector.extract_strided_slice %17 {offsets = [8, 8], sizes = [8, 8], strides = [1, 1]} : vector<16x32xf32> to vector<8x8xf32>
    %cst_46 = arith.constant dense<0.000000e+00> : vector<8x8xf32>
    %96 = tpu.matmul %93, %94, %cst_46 {dimension_numbers = #tpu.dot_dimension_numbers<[1], [1], [0], [0], [0, 0, 1, 0], [], []>} : vector<8x8xf32>, vector<8x8xf32>, vector<8x8xf32> -> vector<8x8xf32>
    %cst_47 = arith.constant dense<0xFF800000> : vector<8xf32>
    %97 = vector.multi_reduction <maximumf>, %96, %cst_47 [1] : vector<8x8xf32> to vector<8xf32>
    %98 = vector.shape_cast %97 : vector<8xf32> to vector<8x1xf32>
    %99 = vector.broadcast %98 : vector<8x1xf32> to vector<8x8xf32>
    %100 = arith.subf %96, %99 : vector<8x8xf32>
    %101 = math.exp %100 : vector<8x8xf32>
    %cst_48 = arith.constant dense<0.000000e+00> : vector<8xf32>
    %102 = vector.multi_reduction <add>, %101, %cst_48 [1] : vector<8x8xf32> to vector<8xf32>
    %103 = vector.shape_cast %102 : vector<8xf32> to vector<8x1xf32>
    %104 = vector.broadcast %103 : vector<8x1xf32> to vector<8x8xf32>
    %105 = arith.divf %101, %104 : vector<8x8xf32>
    %cst_49 = arith.constant dense<0.000000e+00> : vector<8x8xf32>
    %106 = tpu.matmul %105, %95, %cst_49 {dimension_numbers = #tpu.dot_dimension_numbers<[1], [0], [0], [1], [0, 0, 1, 1], [], []>} : vector<8x8xf32>, vector<8x8xf32>, vector<8x8xf32> -> vector<8x8xf32>
    %c8_50 = arith.constant 8 : index
    %c8_51 = arith.constant 8 : index
    %107 = vector.load %arg12[%c8_50, %c8_51] : memref<16x32xf32, #tpu.memory_space<vmem>>, vector<8x8xf32>
    tpu.vector_store %arg12[%c8_50, %c8_51], %106 {strides = array<i32>} : memref<16x32xf32, #tpu.memory_space<vmem>>, vector<8x8xf32>,
    %108 = vector.extract_strided_slice %5 {offsets = [8, 16], sizes = [8, 8], strides = [1, 1]} : vector<16x32xf32> to vector<8x8xf32>
    %109 = vector.extract_strided_slice %11 {offsets = [8, 16], sizes = [8, 8], strides = [1, 1]} : vector<16x32xf32> to vector<8x8xf32>
    %110 = vector.extract_strided_slice %17 {offsets = [8, 16], sizes = [8, 8], strides = [1, 1]} : vector<16x32xf32> to vector<8x8xf32>
    %cst_52 = arith.constant dense<0.000000e+00> : vector<8x8xf32>
    %111 = tpu.matmul %108, %109, %cst_52 {dimension_numbers = #tpu.dot_dimension_numbers<[1], [1], [0], [0], [0, 0, 1, 0], [], []>} : vector<8x8xf32>, vector<8x8xf32>, vector<8x8xf32> -> vector<8x8xf32>
    %cst_53 = arith.constant dense<0xFF800000> : vector<8xf32>
    %112 = vector.multi_reduction <maximumf>, %111, %cst_53 [1] : vector<8x8xf32> to vector<8xf32>
    %113 = vector.shape_cast %112 : vector<8xf32> to vector<8x1xf32>
    %114 = vector.broadcast %113 : vector<8x1xf32> to vector<8x8xf32>
    %115 = arith.subf %111, %114 : vector<8x8xf32>
    %116 = math.exp %115 : vector<8x8xf32>
    %cst_54 = arith.constant dense<0.000000e+00> : vector<8xf32>
    %117 = vector.multi_reduction <add>, %116, %cst_54 [1] : vector<8x8xf32> to vector<8xf32>
    %118 = vector.shape_cast %117 : vector<8xf32> to vector<8x1xf32>
    %119 = vector.broadcast %118 : vector<8x1xf32> to vector<8x8xf32>
    %120 = arith.divf %116, %119 : vector<8x8xf32>
    %cst_55 = arith.constant dense<0.000000e+00> : vector<8x8xf32>
    %121 = tpu.matmul %120, %110, %cst_55 {dimension_numbers = #tpu.dot_dimension_numbers<[1], [0], [0], [1], [0, 0, 1, 1], [], []>} : vector<8x8xf32>, vector<8x8xf32>, vector<8x8xf32> -> vector<8x8xf32>
    %c8_56 = arith.constant 8 : index
    %c16_57 = arith.constant 16 : index
    %122 = vector.load %arg12[%c8_56, %c16_57] : memref<16x32xf32, #tpu.memory_space<vmem>>, vector<8x8xf32>
    tpu.vector_store %arg12[%c8_56, %c16_57], %121 {strides = array<i32>} : memref<16x32xf32, #tpu.memory_space<vmem>>, vector<8x8xf32>,
    %123 = vector.extract_strided_slice %5 {offsets = [8, 24], sizes = [8, 8], strides = [1, 1]} : vector<16x32xf32> to vector<8x8xf32>
    %124 = vector.extract_strided_slice %11 {offsets = [8, 24], sizes = [8, 8], strides = [1, 1]} : vector<16x32xf32> to vector<8x8xf32>
    %125 = vector.extract_strided_slice %17 {offsets = [8, 24], sizes = [8, 8], strides = [1, 1]} : vector<16x32xf32> to vector<8x8xf32>
    %cst_58 = arith.constant dense<0.000000e+00> : vector<8x8xf32>
    %126 = tpu.matmul %123, %124, %cst_58 {dimension_numbers = #tpu.dot_dimension_numbers<[1], [1], [0], [0], [0, 0, 1, 0], [], []>} : vector<8x8xf32>, vector<8x8xf32>, vector<8x8xf32> -> vector<8x8xf32>
    %cst_59 = arith.constant dense<0xFF800000> : vector<8xf32>
    %127 = vector.multi_reduction <maximumf>, %126, %cst_59 [1] : vector<8x8xf32> to vector<8xf32>
    %128 = vector.shape_cast %127 : vector<8xf32> to vector<8x1xf32>
    %129 = vector.broadcast %128 : vector<8x1xf32> to vector<8x8xf32>
    %130 = arith.subf %126, %129 : vector<8x8xf32>
    %131 = math.exp %130 : vector<8x8xf32>
    %cst_60 = arith.constant dense<0.000000e+00> : vector<8xf32>
    %132 = vector.multi_reduction <add>, %131, %cst_60 [1] : vector<8x8xf32> to vector<8xf32>
    %133 = vector.shape_cast %132 : vector<8xf32> to vector<8x1xf32>
    %134 = vector.broadcast %133 : vector<8x1xf32> to vector<8x8xf32>
    %135 = arith.divf %131, %134 : vector<8x8xf32>
    %cst_61 = arith.constant dense<0.000000e+00> : vector<8x8xf32>
    %136 = tpu.matmul %135, %125, %cst_61 {dimension_numbers = #tpu.dot_dimension_numbers<[1], [0], [0], [1], [0, 0, 1, 1], [], []>} : vector<8x8xf32>, vector<8x8xf32>, vector<8x8xf32> -> vector<8x8xf32>
    %c8_62 = arith.constant 8 : index
    %c24_63 = arith.constant 24 : index
    %137 = vector.load %arg12[%c8_62, %c24_63] : memref<16x32xf32, #tpu.memory_space<vmem>>, vector<8x8xf32>
    tpu.vector_store %arg12[%c8_62, %c24_63], %136 {strides = array<i32>} : memref<16x32xf32, #tpu.memory_space<vmem>>, vector<8x8xf32>,
    %c0_64 = arith.constant 0 : index
    %c0_65 = arith.constant 0 : index
    %138 = vector.load %arg12[%c0_64, %c0_65] : memref<16x32xf32, #tpu.memory_space<vmem>>, vector<16x32xf32>
    %c0_66 = arith.constant 0 : index
    %c0_67 = arith.constant 0 : index
    %139 = vector.load %arg6[%c0_66, %c0_67] : memref<32x32xf32, #tpu.memory_space<vmem>>, vector<32x32xf32>
    %cst_68 = arith.constant dense<0.000000e+00> : vector<16x32xf32>
    %140 = tpu.matmul %138, %139, %cst_68 {dimension_numbers = #tpu.dot_dimension_numbers<[1], [0], [0], [1], [0, 0, 1, 1], [], []>} : vector<16x32xf32>, vector<32x32xf32>, vector<16x32xf32> -> vector<16x32xf32>
    %c0_69 = arith.constant 0 : index
    %c0_70 = arith.constant 0 : index
    %141 = vector.load %arg10[%c0_69, %c0_70] : memref<1x32xf32, #tpu.memory_space<vmem>>, vector<1x32xf32>
    %142 = vector.broadcast %141 : vector<1x32xf32> to vector<16x32xf32>
    %143 = arith.addf %140, %142 : vector<16x32xf32>
    %c0_71 = arith.constant 0 : index
    %c0_72 = arith.constant 0 : index
    %144 = vector.load %arg11[%c0_71, %c0_72] : memref<16x32xf32, #tpu.memory_space<vmem>>, vector<16x32xf32>
    tpu.vector_store %arg11[%c0_71, %c0_72], %143 {strides = array<i32>} : memref<16x32xf32, #tpu.memory_space<vmem>>, vector<16x32xf32>,
    return
  }
}

</mosaic_0001>

<llo_original>
// kernel: tpu_custom_call.1
$region0: #{tpu_custom_call.1}
  #allocation0 [shape = 'u32[]', space=smem, size = 0x4, offset = 0x4, fixed_abs, tag = 'smem constant byte address 0x4 - core index']
  #allocation1 [shape = 'u32[144,128]{1,0:T(1,128)}', space=vmem, size = 0x12000, scoped, tag = 'internal scratch']
  #allocation2 [shape = 'f32[16,32]{1,0:T(8,128)}', space=vmem, size = 0x2000, scoped, tag = 'scratch operand']
  %s0 = inlined_call_operand.hbm [shape: f32[16,32], index: 0, kind: input, shape index: {}]
  %s1 = inlined_call_operand.hbm [shape: f32[16,32], index: 1, kind: input, shape index: {}]
  %s2 = inlined_call_operand.hbm [shape: f32[16,32], index: 2, kind: input, shape index: {}]
  %s3 = inlined_call_operand.hbm [shape: f32[32,32], index: 3, kind: input, shape index: {}]
  %s4 = inlined_call_operand.hbm [shape: f32[32,32], index: 4, kind: input, shape index: {}]
  %s5 = inlined_call_operand.hbm [shape: f32[32,32], index: 5, kind: input, shape index: {}]
  %s6 = inlined_call_operand.hbm [shape: f32[32,32], index: 6, kind: input, shape index: {}]
  %s7 = inlined_call_operand.vmem [shape: f32[1,32], index: 7, kind: input, shape index: {}]
  %s8 = inlined_call_operand.vmem [shape: f32[1,32], index: 8, kind: input, shape index: {}]
  %s9 = inlined_call_operand.vmem [shape: f32[1,32], index: 9, kind: input, shape index: {}]
  %s10 = inlined_call_operand.vmem [shape: f32[1,32], index: 10, kind: input, shape index: {}]
  %s11 = inlined_call_operand.hbm [shape: f32[16,32], index: 11, kind: output, shape index: {}]
  %s12 = sld [smem:[#allocation0]]
  $region82: #{tpu_custom_call.1} parent=0
    _
  %s14 = ssub.s32 1, %s12
  %s15 = scalar_select 0, %s14, %s12
  $region1: #{tpu_custom_call.1} parent=0
    #allocation3 [shape = 'u8[8192]{0}', space=vmem, size = 0x2000, scoped, tag = 'input window, operand 0, single buffered']
    #allocation4 [shape = 's32[1]{0}', space=sflag, size = 0x4, scoped, tag = 'scoped memory for tpu_custom_call.1']
    #allocation5 [shape = 's32[1]{0}', space=sflag, size = 0x4, scoped, tag = 'scoped memory for tpu_custom_call.1']
    #allocation6 [shape = 'u8[8192]{0}', space=vmem, size = 0x2000, scoped, tag = 'input window, operand 1, single buffered']
    #allocation7 [shape = 's32[1]{0}', space=sflag, size = 0x4, scoped, tag = 'scoped memory for tpu_custom_call.1']
    #allocation8 [shape = 'u8[8192]{0}', space=vmem, size = 0x2000, scoped, tag = 'input window, operand 2, single buffered']
    #allocation9 [shape = 'u8[16384]{0}', space=vmem, size = 0x4000, scoped, tag = 'input window, operand 3, single buffered']
    #allocation10 [shape = 's32[1]{0}', space=sflag, size = 0x4, scoped, tag = 'scoped memory for tpu_custom_call.1']
    #allocation11 [shape = 'u8[16384]{0}', space=vmem, size = 0x4000, scoped, tag = 'input window, operand 4, single buffered']
    #allocation12 [shape = 'u8[16384]{0}', space=vmem, size = 0x4000, scoped, tag = 'input window, operand 5, single buffered']
    #allocation13 [shape = 's32[1]{0}', space=sflag, size = 0x4, scoped, tag = 'scoped memory for tpu_custom_call.1']
    #allocation14 [shape = 'u8[16384]{0}', space=vmem, size = 0x4000, scoped, tag = 'input window, operand 6, single buffered']
    #allocation15 [shape = 'u8[8192]{0}', space=vmem, size = 0x2000, scoped, tag = 'output window, operand 0, single buffered']
    %16 = vsyncpa [#allocation4], 0
    %17 = vsyncpa [#allocation7], 0
    %18 = vsyncpa [#allocation10], 0
    %19 = vsyncpa [#allocation13], 0
    %20 = vsyncpa [#allocation5], 0
    // Predicated region
    $region2: #{tpu_custom_call.1} parent=1 // pred_check
      _
    $region3: #{tpu_custom_call.1} parent=1 // pred_check_branch
      %22 = sbr.rel (0) target = $region5
    $region4: #{tpu_custom_call.1} parent=1 // pred_region
      %s24 = ssub.s32 256, 256
      %25 = vsyncadd [#allocation4], %s24
      %s26 = sshll.u32 [#allocation3], 4
      %s27 = int_to_ptr.vmem [resolvable:$true] %s26
      %32 = dma.hbm_to_vmem [thread:$0]  %s0, 256, %s27, [#allocation4], 128, 128, 8
    $region5: #{tpu_custom_call.1} parent=1 // pred_fallthru
      _
    // Predicated region
    $region6: #{tpu_custom_call.1} parent=1 // pred_check
      _
    $region7: #{tpu_custom_call.1} parent=1 // pred_check_branch
      %34 = sbr.rel (0) target = $region9
    $region8: #{tpu_custom_call.1} parent=1 // pred_region
      %s36 = ssub.s32 256, 256
      %37 = vsyncadd [#allocation7], %s36
      %s38 = sshll.u32 [#allocation6], 4
      %s39 = int_to_ptr.vmem [resolvable:$true] %s38
      %44 = dma.hbm_to_vmem [thread:$0]  %s1, 256, %s39, [#allocation7], 128, 128, 8
    $region9: #{tpu_custom_call.1} parent=1 // pred_fallthru
      _
    // Predicated region
    $region10: #{tpu_custom_call.1} parent=1 // pred_check
      _
    $region11: #{tpu_custom_call.1} parent=1 // pred_check_branch
      %46 = sbr.rel (0) target = $region13
    $region12: #{tpu_custom_call.1} parent=1 // pred_region
      %s48 = ssub.s32 256, 256
      %49 = vsyncadd [#allocation7], %s48
      %s50 = sshll.u32 [#allocation8], 4
      %s51 = int_to_ptr.vmem [resolvable:$true] %s50
      %56 = dma.hbm_to_vmem [thread:$0]  %s2, 256, %s51, [#allocation7], 128, 128, 8
    $region13: #{tpu_custom_call.1} parent=1 // pred_fallthru
      _
    // Predicated region
    $region14: #{tpu_custom_call.1} parent=1 // pred_check
      _
    $region15: #{tpu_custom_call.1} parent=1 // pred_check_branch
      %58 = sbr.rel (0) target = $region17
    $region16: #{tpu_custom_call.1} parent=1 // pred_region
      %s60 = ssub.s32 512, 512
      %61 = vsyncadd [#allocation10], %s60
      %s62 = sshll.u32 [#allocation9], 4
      %s63 = int_to_ptr.vmem [resolvable:$true] %s62
      %68 = dma.hbm_to_vmem [thread:$0]  %s3, 512, %s63, [#allocation10], 128, 128, 8
    $region17: #{tpu_custom_call.1} parent=1 // pred_fallthru
      _
    // Predicated region
    $region18: #{tpu_custom_call.1} parent=1 // pred_check
      _
    $region19: #{tpu_custom_call.1} parent=1 // pred_check_branch
      %70 = sbr.rel (0) target = $region21
    $region20: #{tpu_custom_call.1} parent=1 // pred_region
      %s72 = ssub.s32 512, 512
      %73 = vsyncadd [#allocation10], %s72
      %s74 = sshll.u32 [#allocation11], 4
      %s75 = int_to_ptr.vmem [resolvable:$true] %s74
      %80 = dma.hbm_to_vmem [thread:$0]  %s4, 512, %s75, [#allocation10], 128, 128, 8
    $region21: #{tpu_custom_call.1} parent=1 // pred_fallthru
      _
    // Predicated region
    $region22: #{tpu_custom_call.1} parent=1 // pred_check
      _
    $region23: #{tpu_custom_call.1} parent=1 // pred_check_branch
      %82 = sbr.rel (0) target = $region25
    $region24: #{tpu_custom_call.1} parent=1 // pred_region
      %s84 = ssub.s32 512, 512
      %85 = vsyncadd [#allocation13], %s84
      %s86 = sshll.u32 [#allocation12], 4
      %s87 = int_to_ptr.vmem [resolvable:$true] %s86
      %92 = dma.hbm_to_vmem [thread:$0]  %s5, 512, %s87, [#allocation13], 128, 128, 8
    $region25: #{tpu_custom_call.1} parent=1 // pred_fallthru
      _
    // Predicated region
    $region26: #{tpu_custom_call.1} parent=1 // pred_check
      _
    $region27: #{tpu_custom_call.1} parent=1 // pred_check_branch
      %94 = sbr.rel (0) target = $region29
    $region28: #{tpu_custom_call.1} parent=1 // pred_region
      %s96 = ssub.s32 512, 512
      %97 = vsyncadd [#allocation13], %s96
      %s98 = sshll.u32 [#allocation14], 4
      %s99 = int_to_ptr.vmem [resolvable:$true] %s98
      %104 = dma.hbm_to_vmem [thread:$0]  %s6, 512, %s99, [#allocation13], 128, 128, 8
    $region29: #{tpu_custom_call.1} parent=1 // pred_fallthru
      _
    // Predicated region
    $region30: #{tpu_custom_call.1} parent=1 // pred_check
      _
    $region31: #{tpu_custom_call.1} parent=1 // pred_check_branch
      %106 = sbr.rel (0) target = $region33
    $region32: #{tpu_custom_call.1} parent=1 // pred_region
      _
    $region33: #{tpu_custom_call.1} parent=1 // pred_fallthru
      _
    // Predicated region
    $region34: #{tpu_custom_call.1} parent=1 // pred_check
      _
    $region35: #{tpu_custom_call.1} parent=1 // pred_check_branch
      %108 = sbr.rel (0) target = $region37
    $region36: #{tpu_custom_call.1} parent=1 // pred_region
      _
    $region37: #{tpu_custom_call.1} parent=1 // pred_fallthru
      _
    // Predicated region
    $region38: #{tpu_custom_call.1} parent=1 // pred_check
      _
    $region39: #{tpu_custom_call.1} parent=1 // pred_check_branch
      %110 = sbr.rel (0) target = $region41
    $region40: #{tpu_custom_call.1} parent=1 // pred_region
      _
    $region41: #{tpu_custom_call.1} parent=1 // pred_fallthru
      _
    // Predicated region
    $region42: #{tpu_custom_call.1} parent=1 // pred_check
      _
    $region43: #{tpu_custom_call.1} parent=1 // pred_check_branch
      %112 = sbr.rel (0) target = $region45
    $region44: #{tpu_custom_call.1} parent=1 // pred_region
      _
    $region45: #{tpu_custom_call.1} parent=1 // pred_fallthru
      _
    // Predicated region
    $region46: #{tpu_custom_call.1} parent=1 // pred_check
      _
    $region47: #{tpu_custom_call.1} parent=1 // pred_check_branch
      %114 = sbr.rel (0) target = $region49
    $region48: #{tpu_custom_call.1} parent=1 // pred_region
      %115 = dma.done [#allocation4], 256
    $region49: #{tpu_custom_call.1} parent=1 // pred_fallthru
      _
    // Predicated region
    $region50: #{tpu_custom_call.1} parent=1 // pred_check
      _
    $region51: #{tpu_custom_call.1} parent=1 // pred_check_branch
      %117 = sbr.rel (0) target = $region53
    $region52: #{tpu_custom_call.1} parent=1 // pred_region
      %118 = dma.done [#allocation7], 256
    $region53: #{tpu_custom_call.1} parent=1 // pred_fallthru
      _
    // Predicated region
    $region54: #{tpu_custom_call.1} parent=1 // pred_check
      _
    $region55: #{tpu_custom_call.1} parent=1 // pred_check_branch
      %120 = sbr.rel (0) target = $region57
    $region56: #{tpu_custom_call.1} parent=1 // pred_region
      %121 = dma.done [#allocation7], 256
    $region57: #{tpu_custom_call.1} parent=1 // pred_fallthru
      _
    // Predicated region
    $region58: #{tpu_custom_call.1} parent=1 // pred_check
      _
    $region59: #{tpu_custom_call.1} parent=1 // pred_check_branch
      %123 = sbr.rel (0) target = $region61
    $region60: #{tpu_custom_call.1} parent=1 // pred_region
      %124 = dma.done [#allocation10], 512
    $region61: #{tpu_custom_call.1} parent=1 // pred_fallthru
      _
    // Predicated region
    $region62: #{tpu_custom_call.1} parent=1 // pred_check
      _
    $region63: #{tpu_custom_call.1} parent=1 // pred_check_branch
      %126 = sbr.rel (0) target = $region65
    $region64: #{tpu_custom_call.1} parent=1 // pred_region
      %127 = dma.done [#allocation10], 512
    $region65: #{tpu_custom_call.1} parent=1 // pred_fallthru
      _
    // Predicated region
    $region66: #{tpu_custom_call.1} parent=1 // pred_check
      _
    $region67: #{tpu_custom_call.1} parent=1 // pred_check_branch
      %129 = sbr.rel (0) target = $region69
    $region68: #{tpu_custom_call.1} parent=1 // pred_region
      %130 = dma.done [#allocation13], 512
    $region69: #{tpu_custom_call.1} parent=1 // pred_fallthru
      _
    // Predicated region
    $region70: #{tpu_custom_call.1} parent=1 // pred_check
      _
    $region71: #{tpu_custom_call.1} parent=1 // pred_check_branch
      %132 = sbr.rel (0) target = $region73
    $region72: #{tpu_custom_call.1} parent=1 // pred_region
      %133 = dma.done [#allocation13], 512
    $region73: #{tpu_custom_call.1} parent=1 // pred_fallthru
      _
    %v134 = vld [vmem:[#allocation3] sm:$0xff]
    %v135 = vld [vmem:[#allocation3 + $0x8] sm:$0xff]
    %v136 = vld [vmem:[#allocation9] sm:$0xff]
    %v137 = vld [vmem:[#allocation9 + $0x8] sm:$0xff]
    %v138 = vld [vmem:[#allocation9 + $0x10] sm:$0xff]
    %v139 = vld [vmem:[#allocation9 + $0x18] sm:$0xff]
    %v140 = vld [vmem:[%s7] sm:$0x1]
    %v142 = vlaneseq
    %v143 = vshrl.u32 %v142, 7
    %v144 = vsub.s32 0, %v143
    %v145 = vrot.slane %v140, %v144
    %vm147 = vcmask 261120
    %v149 = vsel %vm147, %v134, 0
    %v152 = vsel %vm147, %v135, 0
    %154 = vmatprep.subr.mxu0 0.0
    %155 = vmatpush1.msra.mxu0 %v136
    %156 = vmatprep.subr.mxu0 0.0
    %157 = vmatpush1.msra.mxu0 %v137
    %158 = vmatprep.subr.mxu0 0.0
    %159 = vmatpush1.msra.mxu0 %v138
    %160 = vmatprep.subr.mxu0 0.0
    %161 = vmatpush1.msra.mxu0 %v139
    %162 = vmatprep.subr.mxu0 0.0
    %163 = vmatpush1.msra.mxu0 0.0
    %164 = vmatprep.subr.mxu0 0.0
    %165 = vmatpush1.msra.mxu0 0.0
    %166 = vmatprep.subr.mxu0 0.0
    %167 = vmatpush1.msra.mxu0 0.0
    %168 = vmatprep.subr.mxu0 0.0
    %169 = vmatpush1.msra.mxu0 0.0
    %170 = vmatprep.subr.mxu0 0.0
    %171 = vmatpush1.msra.mxu0 0.0
    %172 = vmatprep.subr.mxu0 0.0
    %173 = vmatpush1.msra.mxu0 0.0
    %174 = vmatprep.subr.mxu0 0.0
    %175 = vmatpush1.msra.mxu0 0.0
    %176 = vmatprep.subr.mxu0 0.0
    %177 = vmatpush1.msra.mxu0 0.0
    %178 = vmatprep.subr.mxu0 0.0
    %179 = vmatpush1.msra.mxu0 0.0
    %180 = vmatprep.subr.mxu0 0.0
    %181 = vmatpush1.msra.mxu0 0.0
    %182 = vmatprep.subr.mxu0 0.0
    %183 = vmatpush1.msra.mxu0 0.0
    %184 = vmatprep.subr.mxu0 0.0
    %185 = vmatpush1.msra.mxu0 0.0
    %186 = vmatprep.subr.mxu0 0.0
    %187 = vmatpush1.msra.mxu0 0.0
    %188 = vmatprep.subr.mxu0 0.0
    %189 = vmatpush1.msra.mxu0 0.0
    %190 = vmatprep.subr.mxu0 0.0
    %191 = vmatpush1.msra.mxu0 0.0
    %192 = vmatprep.subr.mxu0 0.0
    %193 = vmatpush1.msra.mxu0 0.0
    %194 = vmatprep.subr.mxu0 0.0
    %195 = vmatpush1.msra.mxu0 0.0
    %196 = vmatprep.subr.mxu0 0.0
    %197 = vmatpush1.msra.mxu0 0.0
    %198 = vmatprep.subr.mxu0 0.0
    %199 = vmatpush1.msra.mxu0 0.0
    %200 = vmatprep.subr.mxu0 0.0
    %201 = vmatpush1.msra.mxu0 0.0
    %202 = vmatprep.subr.mxu0 0.0
    %203 = vmatpush1.msra.mxu0 0.0
    %204 = vmatprep.subr.mxu0 0.0
    %205 = vmatpush1.msra.mxu0 0.0
    %206 = vmatprep.subr.mxu0 0.0
    %207 = vmatpush1.msra.mxu0 0.0
    %208 = vmatprep.subr.mxu0 0.0
    %209 = vmatpush1.msra.mxu0 0.0
    %210 = vmatprep.subr.mxu0 0.0
    %211 = vmatpush1.msra.mxu0 0.0
    %212 = vmatprep.subr.mxu0 0.0
    %213 = vmatpush1.msra.mxu0 0.0
    %214 = vmatprep.subr.mxu0 0.0
    %215 = vmatpush1.msra.mxu0 0.0
    %216 = vmatprep.subr.mxu0 0.0
    %217 = vmatpush1.msra.mxu0 0.0
    %218 = vmatprep.mubr.f32.mxu0 0.0
    %219 = vmatmul.mubr.f32.gmra.mrb[0].mxu0 %v149
    %v220 = vpop.f32.mrb[0].mxu0
    %v221 = vadd.f32 %v145, %v220
    %v222 = vpop.f32.mrb[0].mxu0
    %223 = vmatprep.mubr.f32.mxu0 0.0
    %224 = vmatmul.mubr.f32.gmra.mrb[0].mxu0 %v152
    %v225 = vpop.f32.mrb[0].mxu0
    %v226 = vadd.f32 %v145, %v225
    %v227 = vpop.f32.mrb[0].mxu0
    %228 = vdwg.mxu0
    %v229 = vld [vmem:[#allocation6] sm:$0xff]
    %v230 = vld [vmem:[#allocation6 + $0x8] sm:$0xff]
    %v231 = vld [vmem:[#allocation11] sm:$0xff]
    %v232 = vld [vmem:[#allocation11 + $0x8] sm:$0xff]
    %v233 = vld [vmem:[#allocation11 + $0x10] sm:$0xff]
    %v234 = vld [vmem:[#allocation11 + $0x18] sm:$0xff]
    %v235 = vld [vmem:[%s8] sm:$0x1]
    %v237 = vlaneseq
    %v238 = vshrl.u32 %v237, 7
    %v239 = vsub.s32 0, %v238
    %v240 = vrot.slane %v235, %v239
    %v243 = vsel %vm147, %v229, 0
    %v246 = vsel %vm147, %v230, 0
    %248 = vmatprep.subr.mxu0 0.0
    %249 = vmatpush1.msra.mxu0 %v231
    %250 = vmatprep.subr.mxu0 0.0
    %251 = vmatpush1.msra.mxu0 %v232
    %252 = vmatprep.subr.mxu0 0.0
    %253 = vmatpush1.msra.mxu0 %v233
    %254 = vmatprep.subr.mxu0 0.0
    %255 = vmatpush1.msra.mxu0 %v234
    %256 = vmatprep.subr.mxu0 0.0
    %257 = vmatpush1.msra.mxu0 0.0
    %258 = vmatprep.subr.mxu0 0.0
    %259 = vmatpush1.msra.mxu0 0.0
    %260 = vmatprep.subr.mxu0 0.0
    %261 = vmatpush1.msra.mxu0 0.0
    %262 = vmatprep.subr.mxu0 0.0
    %263 = vmatpush1.msra.mxu0 0.0
    %264 = vmatprep.subr.mxu0 0.0
    %265 = vmatpush1.msra.mxu0 0.0
    %266 = vmatprep.subr.mxu0 0.0
    %267 = vmatpush1.msra.mxu0 0.0
    %268 = vmatprep.subr.mxu0 0.0
    %269 = vmatpush1.msra.mxu0 0.0
    %270 = vmatprep.subr.mxu0 0.0
    %271 = vmatpush1.msra.mxu0 0.0
    %272 = vmatprep.subr.mxu0 0.0
    %273 = vmatpush1.msra.mxu0 0.0
    %274 = vmatprep.subr.mxu0 0.0
    %275 = vmatpush1.msra.mxu0 0.0
    %276 = vmatprep.subr.mxu0 0.0
    %277 = vmatpush1.msra.mxu0 0.0
    %278 = vmatprep.subr.mxu0 0.0
    %279 = vmatpush1.msra.mxu0 0.0
    %280 = vmatprep.subr.mxu0 0.0
    %281 = vmatpush1.msra.mxu0 0.0
    %282 = vmatprep.subr.mxu0 0.0
    %283 = vmatpush1.msra.mxu0 0.0
    %284 = vmatprep.subr.mxu0 0.0
    %285 = vmatpush1.msra.mxu0 0.0
    %286 = vmatprep.subr.mxu0 0.0
    %287 = vmatpush1.msra.mxu0 0.0
    %288 = vmatprep.subr.mxu0 0.0
    %289 = vmatpush1.msra.mxu0 0.0
    %290 = vmatprep.subr.mxu0 0.0
    %291 = vmatpush1.msra.mxu0 0.0
    %292 = vmatprep.subr.mxu0 0.0
    %293 = vmatpush1.msra.mxu0 0.0
    %294 = vmatprep.subr.mxu0 0.0
    %295 = vmatpush1.msra.mxu0 0.0
    %296 = vmatprep.subr.mxu0 0.0
    %297 = vmatpush1.msra.mxu0 0.0
    %298 = vmatprep.subr.mxu0 0.0
    %299 = vmatpush1.msra.mxu0 0.0
    %300 = vmatprep.subr.mxu0 0.0
    %301 = vmatpush1.msra.mxu0 0.0
    %302 = vmatprep.subr.mxu0 0.0
    %303 = vmatpush1.msra.mxu0 0.0
    %304 = vmatprep.subr.mxu0 0.0
    %305 = vmatpush1.msra.mxu0 0.0
    %306 = vmatprep.subr.mxu0 0.0
    %307 = vmatpush1.msra.mxu0 0.0
    %308 = vmatprep.subr.mxu0 0.0
    %309 = vmatpush1.msra.mxu0 0.0
    %310 = vmatprep.subr.mxu0 0.0
    %311 = vmatpush1.msra.mxu0 0.0
    %312 = vmatprep.mubr.f32.mxu0 0.0
    %313 = vmatmul.mubr.f32.gmra.mrb[0].mxu0 %v243
    %v314 = vpop.f32.mrb[0].mxu0
    %v315 = vadd.f32 %v240, %v314
    %v316 = vpop.f32.mrb[0].mxu0
    %317 = vmatprep.mubr.f32.mxu0 0.0
    %318 = vmatmul.mubr.f32.gmra.mrb[0].mxu0 %v246
    %v319 = vpop.f32.mrb[0].mxu0
    %v320 = vadd.f32 %v240, %v319
    %v321 = vpop.f32.mrb[0].mxu0
    %322 = vdwg.mxu0
    %v323 = vld [vmem:[#allocation8] sm:$0xff]
    %v324 = vld [vmem:[#allocation8 + $0x8] sm:$0xff]
    %v325 = vld [vmem:[#allocation12] sm:$0xff]
    %v326 = vld [vmem:[#allocation12 + $0x8] sm:$0xff]
    %v327 = vld [vmem:[#allocation12 + $0x10] sm:$0xff]
    %v328 = vld [vmem:[#allocation12 + $0x18] sm:$0xff]
    %v329 = vld [vmem:[%s9] sm:$0x1]
    %v331 = vlaneseq
    %v332 = vshrl.u32 %v331, 7
    %v333 = vsub.s32 0, %v332
    %v334 = vrot.slane %v329, %v333
    %v337 = vsel %vm147, %v323, 0
    %v340 = vsel %vm147, %v324, 0
    %342 = vmatprep.subr.mxu0 0.0
    %343 = vmatpush1.msra.mxu0 %v325
    %344 = vmatprep.subr.mxu0 0.0
    %345 = vmatpush1.msra.mxu0 %v326
    %346 = vmatprep.subr.mxu0 0.0
    %347 = vmatpush1.msra.mxu0 %v327
    %348 = vmatprep.subr.mxu0 0.0
    %349 = vmatpush1.msra.mxu0 %v328
    %350 = vmatprep.subr.mxu0 0.0
    %351 = vmatpush1.msra.mxu0 0.0
    %352 = vmatprep.subr.mxu0 0.0
    %353 = vmatpush1.msra.mxu0 0.0
    %354 = vmatprep.subr.mxu0 0.0
    %355 = vmatpush1.msra.mxu0 0.0
    %356 = vmatprep.subr.mxu0 0.0
    %357 = vmatpush1.msra.mxu0 0.0
    %358 = vmatprep.subr.mxu0 0.0
    %359 = vmatpush1.msra.mxu0 0.0
    %360 = vmatprep.subr.mxu0 0.0
    %361 = vmatpush1.msra.mxu0 0.0
    %362 = vmatprep.subr.mxu0 0.0
    %363 = vmatpush1.msra.mxu0 0.0
    %364 = vmatprep.subr.mxu0 0.0
    %365 = vmatpush1.msra.mxu0 0.0
    %366 = vmatprep.subr.mxu0 0.0
    %367 = vmatpush1.msra.mxu0 0.0
    %368 = vmatprep.subr.mxu0 0.0
    %369 = vmatpush1.msra.mxu0 0.0
    %370 = vmatprep.subr.mxu0 0.0
    %371 = vmatpush1.msra.mxu0 0.0
    %372 = vmatprep.subr.mxu0 0.0
    %373 = vmatpush1.msra.mxu0 0.0
    %374 = vmatprep.subr.mxu0 0.0
    %375 = vmatpush1.msra.mxu0 0.0
    %376 = vmatprep.subr.mxu0 0.0
    %377 = vmatpush1.msra.mxu0 0.0
    %378 = vmatprep.subr.mxu0 0.0
    %379 = vmatpush1.msra.mxu0 0.0
    %380 = vmatprep.subr.mxu0 0.0
    %381 = vmatpush1.msra.mxu0 0.0
    %382 = vmatprep.subr.mxu0 0.0
    %383 = vmatpush1.msra.mxu0 0.0
    %384 = vmatprep.subr.mxu0 0.0
    %385 = vmatpush1.msra.mxu0 0.0
    %386 = vmatprep.subr.mxu0 0.0
    %387 = vmatpush1.msra.mxu0 0.0
    %388 = vmatprep.subr.mxu0 0.0
    %389 = vmatpush1.msra.mxu0 0.0
    %390 = vmatprep.subr.mxu0 0.0
    %391 = vmatpush1.msra.mxu0 0.0
    %392 = vmatprep.subr.mxu0 0.0
    %393 = vmatpush1.msra.mxu0 0.0
    %394 = vmatprep.subr.mxu0 0.0
    %395 = vmatpush1.msra.mxu0 0.0
    %396 = vmatprep.subr.mxu0 0.0
    %397 = vmatpush1.msra.mxu0 0.0
    %398 = vmatprep.subr.mxu0 0.0
    %399 = vmatpush1.msra.mxu0 0.0
    %400 = vmatprep.subr.mxu0 0.0
    %401 = vmatpush1.msra.mxu0 0.0
    %402 = vmatprep.subr.mxu0 0.0
    %403 = vmatpush1.msra.mxu0 0.0
    %404 = vmatprep.subr.mxu0 0.0
    %405 = vmatpush1.msra.mxu0 0.0
    %406 = vmatprep.mubr.f32.mxu0 0.0
    %407 = vmatmul.mubr.f32.gmra.mrb[0].mxu0 %v337
    %v408 = vpop.f32.mrb[0].mxu0
    %v409 = vadd.f32 %v334, %v408
    %v410 = vpop.f32.mrb[0].mxu0
    %411 = vmatprep.mubr.f32.mxu0 0.0
    %412 = vmatmul.mubr.f32.gmra.mrb[0].mxu0 %v340
    %v413 = vpop.f32.mrb[0].mxu0
    %v414 = vadd.f32 %v334, %v413
    %v415 = vpop.f32.mrb[0].mxu0
    %416 = vdwg.mxu0
    %vm417 = vcmask 64512
    %v419 = vsel %vm417, %v221, 0
    %v422 = vsel %vm417, %v315, 0
    %424 = vmatprep.subr.mxu0 0.0
    %425 = vmatpush1.xpose.msra.mxu0 %v422
    %426 = vmatprep.subr.mxu0 0.0
    %427 = vmatpush1.xpose.msra.mxu0 0.0
    %428 = vmatprep.subr.mxu0 0.0
    %429 = vmatpush1.xpose.msra.mxu0 0.0
    %430 = vmatprep.subr.mxu0 0.0
    %431 = vmatpush1.xpose.msra.mxu0 0.0
    %432 = vmatprep.subr.mxu0 0.0
    %433 = vmatpush1.xpose.msra.mxu0 0.0
    %434 = vmatprep.subr.mxu0 0.0
    %435 = vmatpush1.xpose.msra.mxu0 0.0
    %436 = vmatprep.subr.mxu0 0.0
    %437 = vmatpush1.xpose.msra.mxu0 0.0
    %438 = vmatprep.subr.mxu0 0.0
    %439 = vmatpush1.xpose.msra.mxu0 0.0
    %440 = vmatprep.subr.mxu0 0.0
    %441 = vmatpush1.xpose.msra.mxu0 0.0
    %442 = vmatprep.subr.mxu0 0.0
    %443 = vmatpush1.xpose.msra.mxu0 0.0
    %444 = vmatprep.subr.mxu0 0.0
    %445 = vmatpush1.xpose.msra.mxu0 0.0
    %446 = vmatprep.subr.mxu0 0.0
    %447 = vmatpush1.xpose.msra.mxu0 0.0
    %448 = vmatprep.subr.mxu0 0.0
    %449 = vmatpush1.xpose.msra.mxu0 0.0
    %450 = vmatprep.subr.mxu0 0.0
    %451 = vmatpush1.xpose.msra.mxu0 0.0
    %452 = vmatprep.subr.mxu0 0.0
    %453 = vmatpush1.xpose.msra.mxu0 0.0
    %454 = vmatprep.subr.mxu0 0.0
    %455 = vmatpush1.xpose.msra.mxu0 0.0
    %456 = vmatprep.subr.mxu0 0.0
    %457 = vmatpush1.xpose.msra.mxu0 0.0
    %458 = vmatprep.subr.mxu0 0.0
    %459 = vmatpush1.xpose.msra.mxu0 0.0
    %460 = vmatprep.subr.mxu0 0.0
    %461 = vmatpush1.xpose.msra.mxu0 0.0
    %462 = vmatprep.subr.mxu0 0.0
    %463 = vmatpush1.xpose.msra.mxu0 0.0
    %464 = vmatprep.subr.mxu0 0.0
    %465 = vmatpush1.xpose.msra.mxu0 0.0
    %466 = vmatprep.subr.mxu0 0.0
    %467 = vmatpush1.xpose.msra.mxu0 0.0
    %468 = vmatprep.subr.mxu0 0.0
    %469 = vmatpush1.xpose.msra.mxu0 0.0
    %470 = vmatprep.subr.mxu0 0.0
    %471 = vmatpush1.xpose.msra.mxu0 0.0
    %472 = vmatprep.subr.mxu0 0.0
    %473 = vmatpush1.xpose.msra.mxu0 0.0
    %474 = vmatprep.subr.mxu0 0.0
    %475 = vmatpush1.xpose.msra.mxu0 0.0
    %476 = vmatprep.subr.mxu0 0.0
    %477 = vmatpush1.xpose.msra.mxu0 0.0
    %478 = vmatprep.subr.mxu0 0.0
    %479 = vmatpush1.xpose.msra.mxu0 0.0
    %480 = vmatprep.subr.mxu0 0.0
    %481 = vmatpush1.xpose.msra.mxu0 0.0
    %482 = vmatprep.subr.mxu0 0.0
    %483 = vmatpush1.xpose.msra.mxu0 0.0
    %484 = vmatprep.subr.mxu0 0.0
    %485 = vmatpush1.xpose.msra.mxu0 0.0
    %486 = vmatprep.subr.mxu0 0.0
    %487 = vmatpush1.xpose.msra.mxu0 0.0
    %488 = vmatprep.mubr.f32.mxu0 0.0
    %489 = vmatmul.mubr.f32.gmra.mrb[0].mxu0 %v419
    %v490 = vpop.f32.mrb[0].mxu0
    %v491 = vadd.f32 0.0, %v490
    %v492 = vpop.f32.mrb[0].mxu0
    %493 = vdwg.mxu0
    %v494 = vsel %vm417, %v491, -inf
    %495 = vmax.xlane.f32.xlu0 %v494
    %v496 = vpop.xlane.xlu0 %495
    %v497 = vsub.f32 %v491, %v496
    %v498 = vmul.f32 %v497, 1.442695
    %v499 = vpow.pop %v498
    %v500 = vsel %vm417, %v499, 0.0
    %501 = vadd.xlane.f32.xlu0 %v500
    %v502 = vpop.xlane.xlu0 %501
    %v503 = vrcp.pop %v502
    %v504 = vmul.f32 %v499, %v503
    %v506 = vsel %vm417, %v504, 0
    %508 = vmatprep.subr.mxu0 0.0
    %509 = vmatpush1.msra.mxu0 %v409
    %510 = vmatprep.subr.mxu0 0.0
    %511 = vmatpush1.msra.mxu0 0.0
    %512 = vmatprep.subr.mxu0 0.0
    %513 = vmatpush1.msra.mxu0 0.0
    %514 = vmatprep.subr.mxu0 0.0
    %515 = vmatpush1.msra.mxu0 0.0
    %516 = vmatprep.subr.mxu0 0.0
    %517 = vmatpush1.msra.mxu0 0.0
    %518 = vmatprep.subr.mxu0 0.0
    %519 = vmatpush1.msra.mxu0 0.0
    %520 = vmatprep.subr.mxu0 0.0
    %521 = vmatpush1.msra.mxu0 0.0
    %522 = vmatprep.subr.mxu0 0.0
    %523 = vmatpush1.msra.mxu0 0.0
    %524 = vmatprep.subr.mxu0 0.0
    %525 = vmatpush1.msra.mxu0 0.0
    %526 = vmatprep.subr.mxu0 0.0
    %527 = vmatpush1.msra.mxu0 0.0
    %528 = vmatprep.subr.mxu0 0.0
    %529 = vmatpush1.msra.mxu0 0.0
    %530 = vmatprep.subr.mxu0 0.0
    %531 = vmatpush1.msra.mxu0 0.0
    %532 = vmatprep.subr.mxu0 0.0
    %533 = vmatpush1.msra.mxu0 0.0
    %534 = vmatprep.subr.mxu0 0.0
    %535 = vmatpush1.msra.mxu0 0.0
    %536 = vmatprep.subr.mxu0 0.0
    %537 = vmatpush1.msra.mxu0 0.0
    %538 = vmatprep.subr.mxu0 0.0
    %539 = vmatpush1.msra.mxu0 0.0
    %540 = vmatprep.subr.mxu0 0.0
    %541 = vmatpush1.msra.mxu0 0.0
    %542 = vmatprep.subr.mxu0 0.0
    %543 = vmatpush1.msra.mxu0 0.0
    %544 = vmatprep.subr.mxu0 0.0
    %545 = vmatpush1.msra.mxu0 0.0
    %546 = vmatprep.subr.mxu0 0.0
    %547 = vmatpush1.msra.mxu0 0.0
    %548 = vmatprep.subr.mxu0 0.0
    %549 = vmatpush1.msra.mxu0 0.0
    %550 = vmatprep.subr.mxu0 0.0
    %551 = vmatpush1.msra.mxu0 0.0
    %552 = vmatprep.subr.mxu0 0.0
    %553 = vmatpush1.msra.mxu0 0.0
    %554 = vmatprep.subr.mxu0 0.0
    %555 = vmatpush1.msra.mxu0 0.0
    %556 = vmatprep.subr.mxu0 0.0
    %557 = vmatpush1.msra.mxu0 0.0
    %558 = vmatprep.subr.mxu0 0.0
    %559 = vmatpush1.msra.mxu0 0.0
    %560 = vmatprep.subr.mxu0 0.0
    %561 = vmatpush1.msra.mxu0 0.0
    %562 = vmatprep.subr.mxu0 0.0
    %563 = vmatpush1.msra.mxu0 0.0
    %564 = vmatprep.subr.mxu0 0.0
    %565 = vmatpush1.msra.mxu0 0.0
    %566 = vmatprep.subr.mxu0 0.0
    %567 = vmatpush1.msra.mxu0 0.0
    %568 = vmatprep.subr.mxu0 0.0
    %569 = vmatpush1.msra.mxu0 0.0
    %570 = vmatprep.subr.mxu0 0.0
    %571 = vmatpush1.msra.mxu0 0.0
    %572 = vmatprep.mubr.f32.mxu0 0.0
    %573 = vmatmul.mubr.f32.gmra.mrb[0].mxu0 %v506
    %v574 = vpop.f32.mrb[0].mxu0
    %v575 = vadd.f32 0.0, %v574
    %v576 = vpop.f32.mrb[0].mxu0
    %577 = vdwg.mxu0
    %578 = vst.msk [vmem:[#allocation2] sm:$0xff] %vm417, %v575
    %579 = vrot.lane.b32.xlu0 %v221, 120
    %v580 = vpop.permute.xlu0 %579
    %581 = vrot.lane.b32.xlu0 %v315, 120
    %v582 = vpop.permute.xlu0 %581
    %v583 = vsel %vm417, %v580, 0
    %v585 = vsel %vm417, %v582, 0
    %587 = vmatprep.subr.mxu0 0.0
    %588 = vmatpush1.xpose.msra.mxu0 %v585
    %589 = vmatprep.subr.mxu0 0.0
    %590 = vmatpush1.xpose.msra.mxu0 0.0
    %591 = vmatprep.subr.mxu0 0.0
    %592 = vmatpush1.xpose.msra.mxu0 0.0
    %593 = vmatprep.subr.mxu0 0.0
    %594 = vmatpush1.xpose.msra.mxu0 0.0
    %595 = vmatprep.subr.mxu0 0.0
    %596 = vmatpush1.xpose.msra.mxu0 0.0
    %597 = vmatprep.subr.mxu0 0.0
    %598 = vmatpush1.xpose.msra.mxu0 0.0
    %599 = vmatprep.subr.mxu0 0.0
    %600 = vmatpush1.xpose.msra.mxu0 0.0
    %601 = vmatprep.subr.mxu0 0.0
    %602 = vmatpush1.xpose.msra.mxu0 0.0
    %603 = vmatprep.subr.mxu0 0.0
    %604 = vmatpush1.xpose.msra.mxu0 0.0
    %605 = vmatprep.subr.mxu0 0.0
    %606 = vmatpush1.xpose.msra.mxu0 0.0
    %607 = vmatprep.subr.mxu0 0.0
    %608 = vmatpush1.xpose.msra.mxu0 0.0
    %609 = vmatprep.subr.mxu0 0.0
    %610 = vmatpush1.xpose.msra.mxu0 0.0
    %611 = vmatprep.subr.mxu0 0.0
    %612 = vmatpush1.xpose.msra.mxu0 0.0
    %613 = vmatprep.subr.mxu0 0.0
    %614 = vmatpush1.xpose.msra.mxu0 0.0
    %615 = vmatprep.subr.mxu0 0.0
    %616 = vmatpush1.xpose.msra.mxu0 0.0
    %617 = vmatprep.subr.mxu0 0.0
    %618 = vmatpush1.xpose.msra.mxu0 0.0
    %619 = vmatprep.subr.mxu0 0.0
    %620 = vmatpush1.xpose.msra.mxu0 0.0
    %621 = vmatprep.subr.mxu0 0.0
    %622 = vmatpush1.xpose.msra.mxu0 0.0
    %623 = vmatprep.subr.mxu0 0.0
    %624 = vmatpush1.xpose.msra.mxu0 0.0
    %625 = vmatprep.subr.mxu0 0.0
    %626 = vmatpush1.xpose.msra.mxu0 0.0
    %627 = vmatprep.subr.mxu0 0.0
    %628 = vmatpush1.xpose.msra.mxu0 0.0
    %629 = vmatprep.subr.mxu0 0.0
    %630 = vmatpush1.xpose.msra.mxu0 0.0
    %631 = vmatprep.subr.mxu0 0.0
    %632 = vmatpush1.xpose.msra.mxu0 0.0
    %633 = vmatprep.subr.mxu0 0.0
    %634 = vmatpush1.xpose.msra.mxu0 0.0
    %635 = vmatprep.subr.mxu0 0.0
    %636 = vmatpush1.xpose.msra.mxu0 0.0
    %637 = vmatprep.subr.mxu0 0.0
    %638 = vmatpush1.xpose.msra.mxu0 0.0
    %639 = vmatprep.subr.mxu0 0.0
    %640 = vmatpush1.xpose.msra.mxu0 0.0
    %641 = vmatprep.subr.mxu0 0.0
    %642 = vmatpush1.xpose.msra.mxu0 0.0
    %643 = vmatprep.subr.mxu0 0.0
    %644 = vmatpush1.xpose.msra.mxu0 0.0
    %645 = vmatprep.subr.mxu0 0.0
    %646 = vmatpush1.xpose.msra.mxu0 0.0
    %647 = vmatprep.subr.mxu0 0.0
    %648 = vmatpush1.xpose.msra.mxu0 0.0
    %649 = vmatprep.subr.mxu0 0.0
    %650 = vmatpush1.xpose.msra.mxu0 0.0
    %651 = vmatprep.mubr.f32.mxu0 0.0
    %652 = vmatmul.mubr.f32.gmra.mrb[0].mxu0 %v583
    %v653 = vpop.f32.mrb[0].mxu0
    %v654 = vadd.f32 0.0, %v653
    %v655 = vpop.f32.mrb[0].mxu0
    %656 = vdwg.mxu0
    %v657 = vsel %vm417, %v654, -inf
    %658 = vmax.xlane.f32.xlu0 %v657
    %v659 = vpop.xlane.xlu0 %658
    %v660 = vsub.f32 %v654, %v659
    %v661 = vmul.f32 %v660, 1.442695
    %v662 = vpow.pop %v661
    %v663 = vsel %vm417, %v662, 0.0
    %664 = vadd.xlane.f32.xlu0 %v663
    %v665 = vpop.xlane.xlu0 %664
    %v666 = vrcp.pop %v665
    %v667 = vmul.f32 %v662, %v666
    %669 = vrot.lane.b32.xlu0 %v409, 120
    %v670 = vpop.permute.xlu0 %669
    %v673 = vsel %vm417, %v667, 0
    %675 = vmatprep.subr.mxu0 0.0
    %676 = vmatpush1.msra.mxu0 %v670
    %677 = vmatprep.subr.mxu0 0.0
    %678 = vmatpush1.msra.mxu0 0.0
    %679 = vmatprep.subr.mxu0 0.0
    %680 = vmatpush1.msra.mxu0 0.0
    %681 = vmatprep.subr.mxu0 0.0
    %682 = vmatpush1.msra.mxu0 0.0
    %683 = vmatprep.subr.mxu0 0.0
    %684 = vmatpush1.msra.mxu0 0.0
    %685 = vmatprep.subr.mxu0 0.0
    %686 = vmatpush1.msra.mxu0 0.0
    %687 = vmatprep.subr.mxu0 0.0
    %688 = vmatpush1.msra.mxu0 0.0
    %689 = vmatprep.subr.mxu0 0.0
    %690 = vmatpush1.msra.mxu0 0.0
    %691 = vmatprep.subr.mxu0 0.0
    %692 = vmatpush1.msra.mxu0 0.0
    %693 = vmatprep.subr.mxu0 0.0
    %694 = vmatpush1.msra.mxu0 0.0
    %695 = vmatprep.subr.mxu0 0.0
    %696 = vmatpush1.msra.mxu0 0.0
    %697 = vmatprep.subr.mxu0 0.0
    %698 = vmatpush1.msra.mxu0 0.0
    %699 = vmatprep.subr.mxu0 0.0
    %700 = vmatpush1.msra.mxu0 0.0
    %701 = vmatprep.subr.mxu0 0.0
    %702 = vmatpush1.msra.mxu0 0.0
    %703 = vmatprep.subr.mxu0 0.0
    %704 = vmatpush1.msra.mxu0 0.0
    %705 = vmatprep.subr.mxu0 0.0
    %706 = vmatpush1.msra.mxu0 0.0
    %707 = vmatprep.subr.mxu0 0.0
    %708 = vmatpush1.msra.mxu0 0.0
    %709 = vmatprep.subr.mxu0 0.0
    %710 = vmatpush1.msra.mxu0 0.0
    %711 = vmatprep.subr.mxu0 0.0
    %712 = vmatpush1.msra.mxu0 0.0
    %713 = vmatprep.subr.mxu0 0.0
    %714 = vmatpush1.msra.mxu0 0.0
    %715 = vmatprep.subr.mxu0 0.0
    %716 = vmatpush1.msra.mxu0 0.0
    %717 = vmatprep.subr.mxu0 0.0
    %718 = vmatpush1.msra.mxu0 0.0
    %719 = vmatprep.subr.mxu0 0.0
    %720 = vmatpush1.msra.mxu0 0.0
    %721 = vmatprep.subr.mxu0 0.0
    %722 = vmatpush1.msra.mxu0 0.0
    %723 = vmatprep.subr.mxu0 0.0
    %724 = vmatpush1.msra.mxu0 0.0
    %725 = vmatprep.subr.mxu0 0.0
    %726 = vmatpush1.msra.mxu0 0.0
    %727 = vmatprep.subr.mxu0 0.0
    %728 = vmatpush1.msra.mxu0 0.0
    %729 = vmatprep.subr.mxu0 0.0
    %730 = vmatpush1.msra.mxu0 0.0
    %731 = vmatprep.subr.mxu0 0.0
    %732 = vmatpush1.msra.mxu0 0.0
    %733 = vmatprep.subr.mxu0 0.0
    %734 = vmatpush1.msra.mxu0 0.0
    %735 = vmatprep.subr.mxu0 0.0
    %736 = vmatpush1.msra.mxu0 0.0
    %737 = vmatprep.subr.mxu0 0.0
    %738 = vmatpush1.msra.mxu0 0.0
    %739 = vmatprep.mubr.f32.mxu0 0.0
    %740 = vmatmul.mubr.f32.gmra.mrb[0].mxu0 %v673
    %v741 = vpop.f32.mrb[0].mxu0
    %v742 = vadd.f32 0.0, %v741
    %v743 = vpop.f32.mrb[0].mxu0
    %744 = vdwg.mxu0
    %746 = vrot.lane.b32.xlu0 %v742, 8
    %v747 = vpop.permute.xlu0 %746
    %vm749 = vcmask 130112
    %750 = vst.msk [vmem:[#allocation2] sm:$0xff] %vm749, %v747
    %751 = vrot.lane.b32.xlu0 %v221, 112
    %v752 = vpop.permute.xlu0 %751
    %753 = vrot.lane.b32.xlu0 %v315, 112
    %v754 = vpop.permute.xlu0 %753
    %v755 = vsel %vm417, %v752, 0
    %v757 = vsel %vm417, %v754, 0
    %759 = vmatprep.subr.mxu0 0.0
    %760 = vmatpush1.xpose.msra.mxu0 %v757
    %761 = vmatprep.subr.mxu0 0.0
    %762 = vmatpush1.xpose.msra.mxu0 0.0
    %763 = vmatprep.subr.mxu0 0.0
    %764 = vmatpush1.xpose.msra.mxu0 0.0
    %765 = vmatprep.subr.mxu0 0.0
    %766 = vmatpush1.xpose.msra.mxu0 0.0
    %767 = vmatprep.subr.mxu0 0.0
    %768 = vmatpush1.xpose.msra.mxu0 0.0
    %769 = vmatprep.subr.mxu0 0.0
    %770 = vmatpush1.xpose.msra.mxu0 0.0
    %771 = vmatprep.subr.mxu0 0.0
    %772 = vmatpush1.xpose.msra.mxu0 0.0
    %773 = vmatprep.subr.mxu0 0.0
    %774 = vmatpush1.xpose.msra.mxu0 0.0
    %775 = vmatprep.subr.mxu0 0.0
    %776 = vmatpush1.xpose.msra.mxu0 0.0
    %777 = vmatprep.subr.mxu0 0.0
    %778 = vmatpush1.xpose.msra.mxu0 0.0
    %779 = vmatprep.subr.mxu0 0.0
    %780 = vmatpush1.xpose.msra.mxu0 0.0
    %781 = vmatprep.subr.mxu0 0.0
    %782 = vmatpush1.xpose.msra.mxu0 0.0
    %783 = vmatprep.subr.mxu0 0.0
    %784 = vmatpush1.xpose.msra.mxu0 0.0
    %785 = vmatprep.subr.mxu0 0.0
    %786 = vmatpush1.xpose.msra.mxu0 0.0
    %787 = vmatprep.subr.mxu0 0.0
    %788 = vmatpush1.xpose.msra.mxu0 0.0
    %789 = vmatprep.subr.mxu0 0.0
    %790 = vmatpush1.xpose.msra.mxu0 0.0
    %791 = vmatprep.subr.mxu0 0.0
    %792 = vmatpush1.xpose.msra.mxu0 0.0
    %793 = vmatprep.subr.mxu0 0.0
    %794 = vmatpush1.xpose.msra.mxu0 0.0
    %795 = vmatprep.subr.mxu0 0.0
    %796 = vmatpush1.xpose.msra.mxu0 0.0
    %797 = vmatprep.subr.mxu0 0.0
    %798 = vmatpush1.xpose.msra.mxu0 0.0
    %799 = vmatprep.subr.mxu0 0.0
    %800 = vmatpush1.xpose.msra.mxu0 0.0
    %801 = vmatprep.subr.mxu0 0.0
    %802 = vmatpush1.xpose.msra.mxu0 0.0
    %803 = vmatprep.subr.mxu0 0.0
    %804 = vmatpush1.xpose.msra.mxu0 0.0
    %805 = vmatprep.subr.mxu0 0.0
    %806 = vmatpush1.xpose.msra.mxu0 0.0
    %807 = vmatprep.subr.mxu0 0.0
    %808 = vmatpush1.xpose.msra.mxu0 0.0
    %809 = vmatprep.subr.mxu0 0.0
    %810 = vmatpush1.xpose.msra.mxu0 0.0
    %811 = vmatprep.subr.mxu0 0.0
    %812 = vmatpush1.xpose.msra.mxu0 0.0
    %813 = vmatprep.subr.mxu0 0.0
    %814 = vmatpush1.xpose.msra.mxu0 0.0
    %815 = vmatprep.subr.mxu0 0.0
    %816 = vmatpush1.xpose.msra.mxu0 0.0
    %817 = vmatprep.subr.mxu0 0.0
    %818 = vmatpush1.xpose.msra.mxu0 0.0
    %819 = vmatprep.subr.mxu0 0.0
    %820 = vmatpush1.xpose.msra.mxu0 0.0
    %821 = vmatprep.subr.mxu0 0.0
    %822 = vmatpush1.xpose.msra.mxu0 0.0
    %823 = vmatprep.mubr.f32.mxu0 0.0
    %824 = vmatmul.mubr.f32.gmra.mrb[0].mxu0 %v755
    %v825 = vpop.f32.mrb[0].mxu0
    %v826 = vadd.f32 0.0, %v825
    %v827 = vpop.f32.mrb[0].mxu0
    %828 = vdwg.mxu0
    %v829 = vsel %vm417, %v826, -inf
    %830 = vmax.xlane.f32.xlu0 %v829
    %v831 = vpop.xlane.xlu0 %830
    %v832 = vsub.f32 %v826, %v831
    %v833 = vmul.f32 %v832, 1.442695
    %v834 = vpow.pop %v833
    %v835 = vsel %vm417, %v834, 0.0
    %836 = vadd.xlane.f32.xlu0 %v835
    %v837 = vpop.xlane.xlu0 %836
    %v838 = vrcp.pop %v837
    %v839 = vmul.f32 %v834, %v838
    %840 = vrot.lane.b32.xlu0 %v409, 112
    %v841 = vpop.permute.xlu0 %840
    %v844 = vsel %vm417, %v839, 0
    %846 = vmatprep.subr.mxu0 0.0
    %847 = vmatpush1.msra.mxu0 %v841
    %848 = vmatprep.subr.mxu0 0.0
    %849 = vmatpush1.msra.mxu0 0.0
    %850 = vmatprep.subr.mxu0 0.0
    %851 = vmatpush1.msra.mxu0 0.0
    %852 = vmatprep.subr.mxu0 0.0
    %853 = vmatpush1.msra.mxu0 0.0
    %854 = vmatprep.subr.mxu0 0.0
    %855 = vmatpush1.msra.mxu0 0.0
    %856 = vmatprep.subr.mxu0 0.0
    %857 = vmatpush1.msra.mxu0 0.0
    %858 = vmatprep.subr.mxu0 0.0
    %859 = vmatpush1.msra.mxu0 0.0
    %860 = vmatprep.subr.mxu0 0.0
    %861 = vmatpush1.msra.mxu0 0.0
    %862 = vmatprep.subr.mxu0 0.0
    %863 = vmatpush1.msra.mxu0 0.0
    %864 = vmatprep.subr.mxu0 0.0
    %865 = vmatpush1.msra.mxu0 0.0
    %866 = vmatprep.subr.mxu0 0.0
    %867 = vmatpush1.msra.mxu0 0.0
    %868 = vmatprep.subr.mxu0 0.0
    %869 = vmatpush1.msra.mxu0 0.0
    %870 = vmatprep.subr.mxu0 0.0
    %871 = vmatpush1.msra.mxu0 0.0
    %872 = vmatprep.subr.mxu0 0.0
    %873 = vmatpush1.msra.mxu0 0.0
    %874 = vmatprep.subr.mxu0 0.0
    %875 = vmatpush1.msra.mxu0 0.0
    %876 = vmatprep.subr.mxu0 0.0
    %877 = vmatpush1.msra.mxu0 0.0
    %878 = vmatprep.subr.mxu0 0.0
    %879 = vmatpush1.msra.mxu0 0.0
    %880 = vmatprep.subr.mxu0 0.0
    %881 = vmatpush1.msra.mxu0 0.0
    %882 = vmatprep.subr.mxu0 0.0
    %883 = vmatpush1.msra.mxu0 0.0
    %884 = vmatprep.subr.mxu0 0.0
    %885 = vmatpush1.msra.mxu0 0.0
    %886 = vmatprep.subr.mxu0 0.0
    %887 = vmatpush1.msra.mxu0 0.0
    %888 = vmatprep.subr.mxu0 0.0
    %889 = vmatpush1.msra.mxu0 0.0
    %890 = vmatprep.subr.mxu0 0.0
    %891 = vmatpush1.msra.mxu0 0.0
    %892 = vmatprep.subr.mxu0 0.0
    %893 = vmatpush1.msra.mxu0 0.0
    %894 = vmatprep.subr.mxu0 0.0
    %895 = vmatpush1.msra.mxu0 0.0
    %896 = vmatprep.subr.mxu0 0.0
    %897 = vmatpush1.msra.mxu0 0.0
    %898 = vmatprep.subr.mxu0 0.0
    %899 = vmatpush1.msra.mxu0 0.0
    %900 = vmatprep.subr.mxu0 0.0
    %901 = vmatpush1.msra.mxu0 0.0
    %902 = vmatprep.subr.mxu0 0.0
    %903 = vmatpush1.msra.mxu0 0.0
    %904 = vmatprep.subr.mxu0 0.0
    %905 = vmatpush1.msra.mxu0 0.0
    %906 = vmatprep.subr.mxu0 0.0
    %907 = vmatpush1.msra.mxu0 0.0
    %908 = vmatprep.subr.mxu0 0.0
    %909 = vmatpush1.msra.mxu0 0.0
    %910 = vmatprep.mubr.f32.mxu0 0.0
    %911 = vmatmul.mubr.f32.gmra.mrb[0].mxu0 %v844
    %v912 = vpop.f32.mrb[0].mxu0
    %v913 = vadd.f32 0.0, %v912
    %v914 = vpop.f32.mrb[0].mxu0
    %915 = vdwg.mxu0
    %917 = vrot.lane.b32.xlu0 %v913, 16
    %v918 = vpop.permute.xlu0 %917
    %vm920 = vcmask 195712
    %921 = vst.msk [vmem:[#allocation2] sm:$0xff] %vm920, %v918
    %922 = vrot.lane.b32.xlu0 %v221, 104
    %v923 = vpop.permute.xlu0 %922
    %924 = vrot.lane.b32.xlu0 %v315, 104
    %v925 = vpop.permute.xlu0 %924
    %v926 = vsel %vm417, %v923, 0
    %v928 = vsel %vm417, %v925, 0
    %930 = vmatprep.subr.mxu0 0.0
    %931 = vmatpush1.xpose.msra.mxu0 %v928
    %932 = vmatprep.subr.mxu0 0.0
    %933 = vmatpush1.xpose.msra.mxu0 0.0
    %934 = vmatprep.subr.mxu0 0.0
    %935 = vmatpush1.xpose.msra.mxu0 0.0
    %936 = vmatprep.subr.mxu0 0.0
    %937 = vmatpush1.xpose.msra.mxu0 0.0
    %938 = vmatprep.subr.mxu0 0.0
    %939 = vmatpush1.xpose.msra.mxu0 0.0
    %940 = vmatprep.subr.mxu0 0.0
    %941 = vmatpush1.xpose.msra.mxu0 0.0
    %942 = vmatprep.subr.mxu0 0.0
    %943 = vmatpush1.xpose.msra.mxu0 0.0
    %944 = vmatprep.subr.mxu0 0.0
    %945 = vmatpush1.xpose.msra.mxu0 0.0
    %946 = vmatprep.subr.mxu0 0.0
    %947 = vmatpush1.xpose.msra.mxu0 0.0
    %948 = vmatprep.subr.mxu0 0.0
    %949 = vmatpush1.xpose.msra.mxu0 0.0
    %950 = vmatprep.subr.mxu0 0.0
    %951 = vmatpush1.xpose.msra.mxu0 0.0
    %952 = vmatprep.subr.mxu0 0.0
    %953 = vmatpush1.xpose.msra.mxu0 0.0
    %954 = vmatprep.subr.mxu0 0.0
    %955 = vmatpush1.xpose.msra.mxu0 0.0
    %956 = vmatprep.subr.mxu0 0.0
    %957 = vmatpush1.xpose.msra.mxu0 0.0
    %958 = vmatprep.subr.mxu0 0.0
    %959 = vmatpush1.xpose.msra.mxu0 0.0
    %960 = vmatprep.subr.mxu0 0.0
    %961 = vmatpush1.xpose.msra.mxu0 0.0
    %962 = vmatprep.subr.mxu0 0.0
    %963 = vmatpush1.xpose.msra.mxu0 0.0
    %964 = vmatprep.subr.mxu0 0.0
    %965 = vmatpush1.xpose.msra.mxu0 0.0
    %966 = vmatprep.subr.mxu0 0.0
    %967 = vmatpush1.xpose.msra.mxu0 0.0
    %968 = vmatprep.subr.mxu0 0.0
    %969 = vmatpush1.xpose.msra.mxu0 0.0
    %970 = vmatprep.subr.mxu0 0.0
    %971 = vmatpush1.xpose.msra.mxu0 0.0
    %972 = vmatprep.subr.mxu0 0.0
    %973 = vmatpush1.xpose.msra.mxu0 0.0
    %974 = vmatprep.subr.mxu0 0.0
    %975 = vmatpush1.xpose.msra.mxu0 0.0
    %976 = vmatprep.subr.mxu0 0.0
    %977 = vmatpush1.xpose.msra.mxu0 0.0
    %978 = vmatprep.subr.mxu0 0.0
    %979 = vmatpush1.xpose.msra.mxu0 0.0
    %980 = vmatprep.subr.mxu0 0.0
    %981 = vmatpush1.xpose.msra.mxu0 0.0
    %982 = vmatprep.subr.mxu0 0.0
    %983 = vmatpush1.xpose.msra.mxu0 0.0
    %984 = vmatprep.subr.mxu0 0.0
    %985 = vmatpush1.xpose.msra.mxu0 0.0
    %986 = vmatprep.subr.mxu0 0.0
    %987 = vmatpush1.xpose.msra.mxu0 0.0
    %988 = vmatprep.subr.mxu0 0.0
    %989 = vmatpush1.xpose.msra.mxu0 0.0
    %990 = vmatprep.subr.mxu0 0.0
    %991 = vmatpush1.xpose.msra.mxu0 0.0
    %992 = vmatprep.subr.mxu0 0.0
    %993 = vmatpush1.xpose.msra.mxu0 0.0
    %994 = vmatprep.mubr.f32.mxu0 0.0
    %995 = vmatmul.mubr.f32.gmra.mrb[0].mxu0 %v926
    %v996 = vpop.f32.mrb[0].mxu0
    %v997 = vadd.f32 0.0, %v996
    %v998 = vpop.f32.mrb[0].mxu0
    %999 = vdwg.mxu0
    %v1000 = vsel %vm417, %v997, -inf
    %1001 = vmax.xlane.f32.xlu0 %v1000
    %v1002 = vpop.xlane.xlu0 %1001
    %v1003 = vsub.f32 %v997, %v1002
    %v1004 = vmul.f32 %v1003, 1.442695
    %v1005 = vpow.pop %v1004
    %v1006 = vsel %vm417, %v1005, 0.0
    %1007 = vadd.xlane.f32.xlu0 %v1006
    %v1008 = vpop.xlane.xlu0 %1007
    %v1009 = vrcp.pop %v1008
    %v1010 = vmul.f32 %v1005, %v1009
    %1011 = vrot.lane.b32.xlu0 %v409, 104
    %v1012 = vpop.permute.xlu0 %1011
    %v1015 = vsel %vm417, %v1010, 0
    %1017 = vmatprep.subr.mxu0 0.0
    %1018 = vmatpush1.msra.mxu0 %v1012
    %1019 = vmatprep.subr.mxu0 0.0
    %1020 = vmatpush1.msra.mxu0 0.0
    %1021 = vmatprep.subr.mxu0 0.0
    %1022 = vmatpush1.msra.mxu0 0.0
    %1023 = vmatprep.subr.mxu0 0.0
    %1024 = vmatpush1.msra.mxu0 0.0
    %1025 = vmatprep.subr.mxu0 0.0
    %1026 = vmatpush1.msra.mxu0 0.0
    %1027 = vmatprep.subr.mxu0 0.0
    %1028 = vmatpush1.msra.mxu0 0.0
    %1029 = vmatprep.subr.mxu0 0.0
    %1030 = vmatpush1.msra.mxu0 0.0
    %1031 = vmatprep.subr.mxu0 0.0
    %1032 = vmatpush1.msra.mxu0 0.0
    %1033 = vmatprep.subr.mxu0 0.0
    %1034 = vmatpush1.msra.mxu0 0.0
    %1035 = vmatprep.subr.mxu0 0.0
    %1036 = vmatpush1.msra.mxu0 0.0
    %1037 = vmatprep.subr.mxu0 0.0
    %1038 = vmatpush1.msra.mxu0 0.0
    %1039 = vmatprep.subr.mxu0 0.0
    %1040 = vmatpush1.msra.mxu0 0.0
    %1041 = vmatprep.subr.mxu0 0.0
    %1042 = vmatpush1.msra.mxu0 0.0
    %1043 = vmatprep.subr.mxu0 0.0
    %1044 = vmatpush1.msra.mxu0 0.0
    %1045 = vmatprep.subr.mxu0 0.0
    %1046 = vmatpush1.msra.mxu0 0.0
    %1047 = vmatprep.subr.mxu0 0.0
    %1048 = vmatpush1.msra.mxu0 0.0
    %1049 = vmatprep.subr.mxu0 0.0
    %1050 = vmatpush1.msra.mxu0 0.0
    %1051 = vmatprep.subr.mxu0 0.0
    %1052 = vmatpush1.msra.mxu0 0.0
    %1053 = vmatprep.subr.mxu0 0.0
    %1054 = vmatpush1.msra.mxu0 0.0
    %1055 = vmatprep.subr.mxu0 0.0
    %1056 = vmatpush1.msra.mxu0 0.0
    %1057 = vmatprep.subr.mxu0 0.0
    %1058 = vmatpush1.msra.mxu0 0.0
    %1059 = vmatprep.subr.mxu0 0.0
    %1060 = vmatpush1.msra.mxu0 0.0
    %1061 = vmatprep.subr.mxu0 0.0
    %1062 = vmatpush1.msra.mxu0 0.0
    %1063 = vmatprep.subr.mxu0 0.0
    %1064 = vmatpush1.msra.mxu0 0.0
    %1065 = vmatprep.subr.mxu0 0.0
    %1066 = vmatpush1.msra.mxu0 0.0
    %1067 = vmatprep.subr.mxu0 0.0
    %1068 = vmatpush1.msra.mxu0 0.0
    %1069 = vmatprep.subr.mxu0 0.0
    %1070 = vmatpush1.msra.mxu0 0.0
    %1071 = vmatprep.subr.mxu0 0.0
    %1072 = vmatpush1.msra.mxu0 0.0
    %1073 = vmatprep.subr.mxu0 0.0
    %1074 = vmatpush1.msra.mxu0 0.0
    %1075 = vmatprep.subr.mxu0 0.0
    %1076 = vmatpush1.msra.mxu0 0.0
    %1077 = vmatprep.subr.mxu0 0.0
    %1078 = vmatpush1.msra.mxu0 0.0
    %1079 = vmatprep.subr.mxu0 0.0
    %1080 = vmatpush1.msra.mxu0 0.0
    %1081 = vmatprep.mubr.f32.mxu0 0.0
    %1082 = vmatmul.mubr.f32.gmra.mrb[0].mxu0 %v1015
    %v1083 = vpop.f32.mrb[0].mxu0
    %v1084 = vadd.f32 0.0, %v1083
    %v1085 = vpop.f32.mrb[0].mxu0
    %1086 = vdwg.mxu0
    %1088 = vrot.lane.b32.xlu0 %v1084, 24
    %v1089 = vpop.permute.xlu0 %1088
    %vm1091 = vcmask 261312
    %1092 = vst.msk [vmem:[#allocation2] sm:$0xff] %vm1091, %v1089
    %v1094 = vsel %vm417, %v226, 0
    %v1097 = vsel %vm417, %v320, 0
    %1099 = vmatprep.subr.mxu0 0.0
    %1100 = vmatpush1.xpose.msra.mxu0 %v1097
    %1101 = vmatprep.subr.mxu0 0.0
    %1102 = vmatpush1.xpose.msra.mxu0 0.0
    %1103 = vmatprep.subr.mxu0 0.0
    %1104 = vmatpush1.xpose.msra.mxu0 0.0
    %1105 = vmatprep.subr.mxu0 0.0
    %1106 = vmatpush1.xpose.msra.mxu0 0.0
    %1107 = vmatprep.subr.mxu0 0.0
    %1108 = vmatpush1.xpose.msra.mxu0 0.0
    %1109 = vmatprep.subr.mxu0 0.0
    %1110 = vmatpush1.xpose.msra.mxu0 0.0
    %1111 = vmatprep.subr.mxu0 0.0
    %1112 = vmatpush1.xpose.msra.mxu0 0.0
    %1113 = vmatprep.subr.mxu0 0.0
    %1114 = vmatpush1.xpose.msra.mxu0 0.0
    %1115 = vmatprep.subr.mxu0 0.0
    %1116 = vmatpush1.xpose.msra.mxu0 0.0
    %1117 = vmatprep.subr.mxu0 0.0
    %1118 = vmatpush1.xpose.msra.mxu0 0.0
    %1119 = vmatprep.subr.mxu0 0.0
    %1120 = vmatpush1.xpose.msra.mxu0 0.0
    %1121 = vmatprep.subr.mxu0 0.0
    %1122 = vmatpush1.xpose.msra.mxu0 0.0
    %1123 = vmatprep.subr.mxu0 0.0
    %1124 = vmatpush1.xpose.msra.mxu0 0.0
    %1125 = vmatprep.subr.mxu0 0.0
    %1126 = vmatpush1.xpose.msra.mxu0 0.0
    %1127 = vmatprep.subr.mxu0 0.0
    %1128 = vmatpush1.xpose.msra.mxu0 0.0
    %1129 = vmatprep.subr.mxu0 0.0
    %1130 = vmatpush1.xpose.msra.mxu0 0.0
    %1131 = vmatprep.subr.mxu0 0.0
    %1132 = vmatpush1.xpose.msra.mxu0 0.0
    %1133 = vmatprep.subr.mxu0 0.0
    %1134 = vmatpush1.xpose.msra.mxu0 0.0
    %1135 = vmatprep.subr.mxu0 0.0
    %1136 = vmatpush1.xpose.msra.mxu0 0.0
    %1137 = vmatprep.subr.mxu0 0.0
    %1138 = vmatpush1.xpose.msra.mxu0 0.0
    %1139 = vmatprep.subr.mxu0 0.0
    %1140 = vmatpush1.xpose.msra.mxu0 0.0
    %1141 = vmatprep.subr.mxu0 0.0
    %1142 = vmatpush1.xpose.msra.mxu0 0.0
    %1143 = vmatprep.subr.mxu0 0.0
    %1144 = vmatpush1.xpose.msra.mxu0 0.0
    %1145 = vmatprep.subr.mxu0 0.0
    %1146 = vmatpush1.xpose.msra.mxu0 0.0
    %1147 = vmatprep.subr.mxu0 0.0
    %1148 = vmatpush1.xpose.msra.mxu0 0.0
    %1149 = vmatprep.subr.mxu0 0.0
    %1150 = vmatpush1.xpose.msra.mxu0 0.0
    %1151 = vmatprep.subr.mxu0 0.0
    %1152 = vmatpush1.xpose.msra.mxu0 0.0
    %1153 = vmatprep.subr.mxu0 0.0
    %1154 = vmatpush1.xpose.msra.mxu0 0.0
    %1155 = vmatprep.subr.mxu0 0.0
    %1156 = vmatpush1.xpose.msra.mxu0 0.0
    %1157 = vmatprep.subr.mxu0 0.0
    %1158 = vmatpush1.xpose.msra.mxu0 0.0
    %1159 = vmatprep.subr.mxu0 0.0
    %1160 = vmatpush1.xpose.msra.mxu0 0.0
    %1161 = vmatprep.subr.mxu0 0.0
    %1162 = vmatpush1.xpose.msra.mxu0 0.0
    %1163 = vmatprep.mubr.f32.mxu0 0.0
    %1164 = vmatmul.mubr.f32.gmra.mrb[0].mxu0 %v1094
    %v1165 = vpop.f32.mrb[0].mxu0
    %v1166 = vadd.f32 0.0, %v1165
    %v1167 = vpop.f32.mrb[0].mxu0
    %1168 = vdwg.mxu0
    %v1169 = vsel %vm417, %v1166, -inf
    %1170 = vmax.xlane.f32.xlu0 %v1169
    %v1171 = vpop.xlane.xlu0 %1170
    %v1172 = vsub.f32 %v1166, %v1171
    %v1173 = vmul.f32 %v1172, 1.442695
    %v1174 = vpow.pop %v1173
    %v1175 = vsel %vm417, %v1174, 0.0
    %1176 = vadd.xlane.f32.xlu0 %v1175
    %v1177 = vpop.xlane.xlu0 %1176
    %v1178 = vrcp.pop %v1177
    %v1179 = vmul.f32 %v1174, %v1178
    %v1181 = vsel %vm417, %v1179, 0
    %1183 = vmatprep.subr.mxu0 0.0
    %1184 = vmatpush1.msra.mxu0 %v414
    %1185 = vmatprep.subr.mxu0 0.0
    %1186 = vmatpush1.msra.mxu0 0.0
    %1187 = vmatprep.subr.mxu0 0.0
    %1188 = vmatpush1.msra.mxu0 0.0
    %1189 = vmatprep.subr.mxu0 0.0
    %1190 = vmatpush1.msra.mxu0 0.0
    %1191 = vmatprep.subr.mxu0 0.0
    %1192 = vmatpush1.msra.mxu0 0.0
    %1193 = vmatprep.subr.mxu0 0.0
    %1194 = vmatpush1.msra.mxu0 0.0
    %1195 = vmatprep.subr.mxu0 0.0
    %1196 = vmatpush1.msra.mxu0 0.0
    %1197 = vmatprep.subr.mxu0 0.0
    %1198 = vmatpush1.msra.mxu0 0.0
    %1199 = vmatprep.subr.mxu0 0.0
    %1200 = vmatpush1.msra.mxu0 0.0
    %1201 = vmatprep.subr.mxu0 0.0
    %1202 = vmatpush1.msra.mxu0 0.0
    %1203 = vmatprep.subr.mxu0 0.0
    %1204 = vmatpush1.msra.mxu0 0.0
    %1205 = vmatprep.subr.mxu0 0.0
    %1206 = vmatpush1.msra.mxu0 0.0
    %1207 = vmatprep.subr.mxu0 0.0
    %1208 = vmatpush1.msra.mxu0 0.0
    %1209 = vmatprep.subr.mxu0 0.0
    %1210 = vmatpush1.msra.mxu0 0.0
    %1211 = vmatprep.subr.mxu0 0.0
    %1212 = vmatpush1.msra.mxu0 0.0
    %1213 = vmatprep.subr.mxu0 0.0
    %1214 = vmatpush1.msra.mxu0 0.0
    %1215 = vmatprep.subr.mxu0 0.0
    %1216 = vmatpush1.msra.mxu0 0.0
    %1217 = vmatprep.subr.mxu0 0.0
    %1218 = vmatpush1.msra.mxu0 0.0
    %1219 = vmatprep.subr.mxu0 0.0
    %1220 = vmatpush1.msra.mxu0 0.0
    %1221 = vmatprep.subr.mxu0 0.0
    %1222 = vmatpush1.msra.mxu0 0.0
    %1223 = vmatprep.subr.mxu0 0.0
    %1224 = vmatpush1.msra.mxu0 0.0
    %1225 = vmatprep.subr.mxu0 0.0
    %1226 = vmatpush1.msra.mxu0 0.0
    %1227 = vmatprep.subr.mxu0 0.0
    %1228 = vmatpush1.msra.mxu0 0.0
    %1229 = vmatprep.subr.mxu0 0.0
    %1230 = vmatpush1.msra.mxu0 0.0
    %1231 = vmatprep.subr.mxu0 0.0
    %1232 = vmatpush1.msra.mxu0 0.0
    %1233 = vmatprep.subr.mxu0 0.0
    %1234 = vmatpush1.msra.mxu0 0.0
    %1235 = vmatprep.subr.mxu0 0.0
    %1236 = vmatpush1.msra.mxu0 0.0
    %1237 = vmatprep.subr.mxu0 0.0
    %1238 = vmatpush1.msra.mxu0 0.0
    %1239 = vmatprep.subr.mxu0 0.0
    %1240 = vmatpush1.msra.mxu0 0.0
    %1241 = vmatprep.subr.mxu0 0.0
    %1242 = vmatpush1.msra.mxu0 0.0
    %1243 = vmatprep.subr.mxu0 0.0
    %1244 = vmatpush1.msra.mxu0 0.0
    %1245 = vmatprep.subr.mxu0 0.0
    %1246 = vmatpush1.msra.mxu0 0.0
    %1247 = vmatprep.mubr.f32.mxu0 0.0
    %1248 = vmatmul.mubr.f32.gmra.mrb[0].mxu0 %v1181
    %v1249 = vpop.f32.mrb[0].mxu0
    %v1250 = vadd.f32 0.0, %v1249
    %v1251 = vpop.f32.mrb[0].mxu0
    %1252 = vdwg.mxu0
    %1253 = vst.msk [vmem:[#allocation2 + $0x8] sm:$0xff] %vm417, %v1250
    %1254 = vrot.lane.b32.xlu0 %v226, 120
    %v1255 = vpop.permute.xlu0 %1254
    %1256 = vrot.lane.b32.xlu0 %v320, 120
    %v1257 = vpop.permute.xlu0 %1256
    %v1258 = vsel %vm417, %v1255, 0
    %v1260 = vsel %vm417, %v1257, 0
    %1262 = vmatprep.subr.mxu0 0.0
    %1263 = vmatpush1.xpose.msra.mxu0 %v1260
    %1264 = vmatprep.subr.mxu0 0.0
    %1265 = vmatpush1.xpose.msra.mxu0 0.0
    %1266 = vmatprep.subr.mxu0 0.0
    %1267 = vmatpush1.xpose.msra.mxu0 0.0
    %1268 = vmatprep.subr.mxu0 0.0
    %1269 = vmatpush1.xpose.msra.mxu0 0.0
    %1270 = vmatprep.subr.mxu0 0.0
    %1271 = vmatpush1.xpose.msra.mxu0 0.0
    %1272 = vmatprep.subr.mxu0 0.0
    %1273 = vmatpush1.xpose.msra.mxu0 0.0
    %1274 = vmatprep.subr.mxu0 0.0
    %1275 = vmatpush1.xpose.msra.mxu0 0.0
    %1276 = vmatprep.subr.mxu0 0.0
    %1277 = vmatpush1.xpose.msra.mxu0 0.0
    %1278 = vmatprep.subr.mxu0 0.0
    %1279 = vmatpush1.xpose.msra.mxu0 0.0
    %1280 = vmatprep.subr.mxu0 0.0
    %1281 = vmatpush1.xpose.msra.mxu0 0.0
    %1282 = vmatprep.subr.mxu0 0.0
    %1283 = vmatpush1.xpose.msra.mxu0 0.0
    %1284 = vmatprep.subr.mxu0 0.0
    %1285 = vmatpush1.xpose.msra.mxu0 0.0
    %1286 = vmatprep.subr.mxu0 0.0
    %1287 = vmatpush1.xpose.msra.mxu0 0.0
    %1288 = vmatprep.subr.mxu0 0.0
    %1289 = vmatpush1.xpose.msra.mxu0 0.0
    %1290 = vmatprep.subr.mxu0 0.0
    %1291 = vmatpush1.xpose.msra.mxu0 0.0
    %1292 = vmatprep.subr.mxu0 0.0
    %1293 = vmatpush1.xpose.msra.mxu0 0.0
    %1294 = vmatprep.subr.mxu0 0.0
    %1295 = vmatpush1.xpose.msra.mxu0 0.0
    %1296 = vmatprep.subr.mxu0 0.0
    %1297 = vmatpush1.xpose.msra.mxu0 0.0
    %1298 = vmatprep.subr.mxu0 0.0
    %1299 = vmatpush1.xpose.msra.mxu0 0.0
    %1300 = vmatprep.subr.mxu0 0.0
    %1301 = vmatpush1.xpose.msra.mxu0 0.0
    %1302 = vmatprep.subr.mxu0 0.0
    %1303 = vmatpush1.xpose.msra.mxu0 0.0
    %1304 = vmatprep.subr.mxu0 0.0
    %1305 = vmatpush1.xpose.msra.mxu0 0.0
    %1306 = vmatprep.subr.mxu0 0.0
    %1307 = vmatpush1.xpose.msra.mxu0 0.0
    %1308 = vmatprep.subr.mxu0 0.0
    %1309 = vmatpush1.xpose.msra.mxu0 0.0
    %1310 = vmatprep.subr.mxu0 0.0
    %1311 = vmatpush1.xpose.msra.mxu0 0.0
    %1312 = vmatprep.subr.mxu0 0.0
    %1313 = vmatpush1.xpose.msra.mxu0 0.0
    %1314 = vmatprep.subr.mxu0 0.0
    %1315 = vmatpush1.xpose.msra.mxu0 0.0
    %1316 = vmatprep.subr.mxu0 0.0
    %1317 = vmatpush1.xpose.msra.mxu0 0.0
    %1318 = vmatprep.subr.mxu0 0.0
    %1319 = vmatpush1.xpose.msra.mxu0 0.0
    %1320 = vmatprep.subr.mxu0 0.0
    %1321 = vmatpush1.xpose.msra.mxu0 0.0
    %1322 = vmatprep.subr.mxu0 0.0
    %1323 = vmatpush1.xpose.msra.mxu0 0.0
    %1324 = vmatprep.subr.mxu0 0.0
    %1325 = vmatpush1.xpose.msra.mxu0 0.0
    %1326 = vmatprep.mubr.f32.mxu0 0.0
    %1327 = vmatmul.mubr.f32.gmra.mrb[0].mxu0 %v1258
    %v1328 = vpop.f32.mrb[0].mxu0
    %v1329 = vadd.f32 0.0, %v1328
    %v1330 = vpop.f32.mrb[0].mxu0
    %1331 = vdwg.mxu0
    %v1332 = vsel %vm417, %v1329, -inf
    %1333 = vmax.xlane.f32.xlu0 %v1332
    %v1334 = vpop.xlane.xlu0 %1333
    %v1335 = vsub.f32 %v1329, %v1334
    %v1336 = vmul.f32 %v1335, 1.442695
    %v1337 = vpow.pop %v1336
    %v1338 = vsel %vm417, %v1337, 0.0
    %1339 = vadd.xlane.f32.xlu0 %v1338
    %v1340 = vpop.xlane.xlu0 %1339
    %v1341 = vrcp.pop %v1340
    %v1342 = vmul.f32 %v1337, %v1341
    %1344 = vrot.lane.b32.xlu0 %v414, 120
    %v1345 = vpop.permute.xlu0 %1344
    %v1348 = vsel %vm417, %v1342, 0
    %1350 = vmatprep.subr.mxu0 0.0
    %1351 = vmatpush1.msra.mxu0 %v1345
    %1352 = vmatprep.subr.mxu0 0.0
    %1353 = vmatpush1.msra.mxu0 0.0
    %1354 = vmatprep.subr.mxu0 0.0
    %1355 = vmatpush1.msra.mxu0 0.0
    %1356 = vmatprep.subr.mxu0 0.0
    %1357 = vmatpush1.msra.mxu0 0.0
    %1358 = vmatprep.subr.mxu0 0.0
    %1359 = vmatpush1.msra.mxu0 0.0
    %1360 = vmatprep.subr.mxu0 0.0
    %1361 = vmatpush1.msra.mxu0 0.0
    %1362 = vmatprep.subr.mxu0 0.0
    %1363 = vmatpush1.msra.mxu0 0.0
    %1364 = vmatprep.subr.mxu0 0.0
    %1365 = vmatpush1.msra.mxu0 0.0
    %1366 = vmatprep.subr.mxu0 0.0
    %1367 = vmatpush1.msra.mxu0 0.0
    %1368 = vmatprep.subr.mxu0 0.0
    %1369 = vmatpush1.msra.mxu0 0.0
    %1370 = vmatprep.subr.mxu0 0.0
    %1371 = vmatpush1.msra.mxu0 0.0
    %1372 = vmatprep.subr.mxu0 0.0
    %1373 = vmatpush1.msra.mxu0 0.0
    %1374 = vmatprep.subr.mxu0 0.0
    %1375 = vmatpush1.msra.mxu0 0.0
    %1376 = vmatprep.subr.mxu0 0.0
    %1377 = vmatpush1.msra.mxu0 0.0
    %1378 = vmatprep.subr.mxu0 0.0
    %1379 = vmatpush1.msra.mxu0 0.0
    %1380 = vmatprep.subr.mxu0 0.0
    %1381 = vmatpush1.msra.mxu0 0.0
    %1382 = vmatprep.subr.mxu0 0.0
    %1383 = vmatpush1.msra.mxu0 0.0
    %1384 = vmatprep.subr.mxu0 0.0
    %1385 = vmatpush1.msra.mxu0 0.0
    %1386 = vmatprep.subr.mxu0 0.0
    %1387 = vmatpush1.msra.mxu0 0.0
    %1388 = vmatprep.subr.mxu0 0.0
    %1389 = vmatpush1.msra.mxu0 0.0
    %1390 = vmatprep.subr.mxu0 0.0
    %1391 = vmatpush1.msra.mxu0 0.0
    %1392 = vmatprep.subr.mxu0 0.0
    %1393 = vmatpush1.msra.mxu0 0.0
    %1394 = vmatprep.subr.mxu0 0.0
    %1395 = vmatpush1.msra.mxu0 0.0
    %1396 = vmatprep.subr.mxu0 0.0
    %1397 = vmatpush1.msra.mxu0 0.0
    %1398 = vmatprep.subr.mxu0 0.0
    %1399 = vmatpush1.msra.mxu0 0.0
    %1400 = vmatprep.subr.mxu0 0.0
    %1401 = vmatpush1.msra.mxu0 0.0
    %1402 = vmatprep.subr.mxu0 0.0
    %1403 = vmatpush1.msra.mxu0 0.0
    %1404 = vmatprep.subr.mxu0 0.0
    %1405 = vmatpush1.msra.mxu0 0.0
    %1406 = vmatprep.subr.mxu0 0.0
    %1407 = vmatpush1.msra.mxu0 0.0
    %1408 = vmatprep.subr.mxu0 0.0
    %1409 = vmatpush1.msra.mxu0 0.0
    %1410 = vmatprep.subr.mxu0 0.0
    %1411 = vmatpush1.msra.mxu0 0.0
    %1412 = vmatprep.subr.mxu0 0.0
    %1413 = vmatpush1.msra.mxu0 0.0
    %1414 = vmatprep.mubr.f32.mxu0 0.0
    %1415 = vmatmul.mubr.f32.gmra.mrb[0].mxu0 %v1348
    %v1416 = vpop.f32.mrb[0].mxu0
    %v1417 = vadd.f32 0.0, %v1416
    %v1418 = vpop.f32.mrb[0].mxu0
    %1419 = vdwg.mxu0
    %1421 = vrot.lane.b32.xlu0 %v1417, 8
    %v1422 = vpop.permute.xlu0 %1421
    %1424 = vst.msk [vmem:[#allocation2 + $0x8] sm:$0xff] %vm749, %v1422
    %1425 = vrot.lane.b32.xlu0 %v226, 112
    %v1426 = vpop.permute.xlu0 %1425
    %1427 = vrot.lane.b32.xlu0 %v320, 112
    %v1428 = vpop.permute.xlu0 %1427
    %v1429 = vsel %vm417, %v1426, 0
    %v1431 = vsel %vm417, %v1428, 0
    %1433 = vmatprep.subr.mxu0 0.0
    %1434 = vmatpush1.xpose.msra.mxu0 %v1431
    %1435 = vmatprep.subr.mxu0 0.0
    %1436 = vmatpush1.xpose.msra.mxu0 0.0
    %1437 = vmatprep.subr.mxu0 0.0
    %1438 = vmatpush1.xpose.msra.mxu0 0.0
    %1439 = vmatprep.subr.mxu0 0.0
    %1440 = vmatpush1.xpose.msra.mxu0 0.0
    %1441 = vmatprep.subr.mxu0 0.0
    %1442 = vmatpush1.xpose.msra.mxu0 0.0
    %1443 = vmatprep.subr.mxu0 0.0
    %1444 = vmatpush1.xpose.msra.mxu0 0.0
    %1445 = vmatprep.subr.mxu0 0.0
    %1446 = vmatpush1.xpose.msra.mxu0 0.0
    %1447 = vmatprep.subr.mxu0 0.0
    %1448 = vmatpush1.xpose.msra.mxu0 0.0
    %1449 = vmatprep.subr.mxu0 0.0
    %1450 = vmatpush1.xpose.msra.mxu0 0.0
    %1451 = vmatprep.subr.mxu0 0.0
    %1452 = vmatpush1.xpose.msra.mxu0 0.0
    %1453 = vmatprep.subr.mxu0 0.0
    %1454 = vmatpush1.xpose.msra.mxu0 0.0
    %1455 = vmatprep.subr.mxu0 0.0
    %1456 = vmatpush1.xpose.msra.mxu0 0.0
    %1457 = vmatprep.subr.mxu0 0.0
    %1458 = vmatpush1.xpose.msra.mxu0 0.0
    %1459 = vmatprep.subr.mxu0 0.0
    %1460 = vmatpush1.xpose.msra.mxu0 0.0
    %1461 = vmatprep.subr.mxu0 0.0
    %1462 = vmatpush1.xpose.msra.mxu0 0.0
    %1463 = vmatprep.subr.mxu0 0.0
    %1464 = vmatpush1.xpose.msra.mxu0 0.0
    %1465 = vmatprep.subr.mxu0 0.0
    %1466 = vmatpush1.xpose.msra.mxu0 0.0
    %1467 = vmatprep.subr.mxu0 0.0
    %1468 = vmatpush1.xpose.msra.mxu0 0.0
    %1469 = vmatprep.subr.mxu0 0.0
    %1470 = vmatpush1.xpose.msra.mxu0 0.0
    %1471 = vmatprep.subr.mxu0 0.0
    %1472 = vmatpush1.xpose.msra.mxu0 0.0
    %1473 = vmatprep.subr.mxu0 0.0
    %1474 = vmatpush1.xpose.msra.mxu0 0.0
    %1475 = vmatprep.subr.mxu0 0.0
    %1476 = vmatpush1.xpose.msra.mxu0 0.0
    %1477 = vmatprep.subr.mxu0 0.0
    %1478 = vmatpush1.xpose.msra.mxu0 0.0
    %1479 = vmatprep.subr.mxu0 0.0
    %1480 = vmatpush1.xpose.msra.mxu0 0.0
    %1481 = vmatprep.subr.mxu0 0.0
    %1482 = vmatpush1.xpose.msra.mxu0 0.0
    %1483 = vmatprep.subr.mxu0 0.0
    %1484 = vmatpush1.xpose.msra.mxu0 0.0
    %1485 = vmatprep.subr.mxu0 0.0
    %1486 = vmatpush1.xpose.msra.mxu0 0.0
    %1487 = vmatprep.subr.mxu0 0.0
    %1488 = vmatpush1.xpose.msra.mxu0 0.0
    %1489 = vmatprep.subr.mxu0 0.0
    %1490 = vmatpush1.xpose.msra.mxu0 0.0
    %1491 = vmatprep.subr.mxu0 0.0
    %1492 = vmatpush1.xpose.msra.mxu0 0.0
    %1493 = vmatprep.subr.mxu0 0.0
    %1494 = vmatpush1.xpose.msra.mxu0 0.0
    %1495 = vmatprep.subr.mxu0 0.0
    %1496 = vmatpush1.xpose.msra.mxu0 0.0
    %1497 = vmatprep.mubr.f32.mxu0 0.0
    %1498 = vmatmul.mubr.f32.gmra.mrb[0].mxu0 %v1429
    %v1499 = vpop.f32.mrb[0].mxu0
    %v1500 = vadd.f32 0.0, %v1499
    %v1501 = vpop.f32.mrb[0].mxu0
    %1502 = vdwg.mxu0
    %v1503 = vsel %vm417, %v1500, -inf
    %1504 = vmax.xlane.f32.xlu0 %v1503
    %v1505 = vpop.xlane.xlu0 %1504
    %v1506 = vsub.f32 %v1500, %v1505
    %v1507 = vmul.f32 %v1506, 1.442695
    %v1508 = vpow.pop %v1507
    %v1509 = vsel %vm417, %v1508, 0.0
    %1510 = vadd.xlane.f32.xlu0 %v1509
    %v1511 = vpop.xlane.xlu0 %1510
    %v1512 = vrcp.pop %v1511
    %v1513 = vmul.f32 %v1508, %v1512
    %1514 = vrot.lane.b32.xlu0 %v414, 112
    %v1515 = vpop.permute.xlu0 %1514
    %v1518 = vsel %vm417, %v1513, 0
    %1520 = vmatprep.subr.mxu0 0.0
    %1521 = vmatpush1.msra.mxu0 %v1515
    %1522 = vmatprep.subr.mxu0 0.0
    %1523 = vmatpush1.msra.mxu0 0.0
    %1524 = vmatprep.subr.mxu0 0.0
    %1525 = vmatpush1.msra.mxu0 0.0
    %1526 = vmatprep.subr.mxu0 0.0
    %1527 = vmatpush1.msra.mxu0 0.0
    %1528 = vmatprep.subr.mxu0 0.0
    %1529 = vmatpush1.msra.mxu0 0.0
    %1530 = vmatprep.subr.mxu0 0.0
    %1531 = vmatpush1.msra.mxu0 0.0
    %1532 = vmatprep.subr.mxu0 0.0
    %1533 = vmatpush1.msra.mxu0 0.0
    %1534 = vmatprep.subr.mxu0 0.0
    %1535 = vmatpush1.msra.mxu0 0.0
    %1536 = vmatprep.subr.mxu0 0.0
    %1537 = vmatpush1.msra.mxu0 0.0
    %1538 = vmatprep.subr.mxu0 0.0
    %1539 = vmatpush1.msra.mxu0 0.0
    %1540 = vmatprep.subr.mxu0 0.0
    %1541 = vmatpush1.msra.mxu0 0.0
    %1542 = vmatprep.subr.mxu0 0.0
    %1543 = vmatpush1.msra.mxu0 0.0
    %1544 = vmatprep.subr.mxu0 0.0
    %1545 = vmatpush1.msra.mxu0 0.0
    %1546 = vmatprep.subr.mxu0 0.0
    %1547 = vmatpush1.msra.mxu0 0.0
    %1548 = vmatprep.subr.mxu0 0.0
    %1549 = vmatpush1.msra.mxu0 0.0
    %1550 = vmatprep.subr.mxu0 0.0
    %1551 = vmatpush1.msra.mxu0 0.0
    %1552 = vmatprep.subr.mxu0 0.0
    %1553 = vmatpush1.msra.mxu0 0.0
    %1554 = vmatprep.subr.mxu0 0.0
    %1555 = vmatpush1.msra.mxu0 0.0
    %1556 = vmatprep.subr.mxu0 0.0
    %1557 = vmatpush1.msra.mxu0 0.0
    %1558 = vmatprep.subr.mxu0 0.0
    %1559 = vmatpush1.msra.mxu0 0.0
    %1560 = vmatprep.subr.mxu0 0.0
    %1561 = vmatpush1.msra.mxu0 0.0
    %1562 = vmatprep.subr.mxu0 0.0
    %1563 = vmatpush1.msra.mxu0 0.0
    %1564 = vmatprep.subr.mxu0 0.0
    %1565 = vmatpush1.msra.mxu0 0.0
    %1566 = vmatprep.subr.mxu0 0.0
    %1567 = vmatpush1.msra.mxu0 0.0
    %1568 = vmatprep.subr.mxu0 0.0
    %1569 = vmatpush1.msra.mxu0 0.0
    %1570 = vmatprep.subr.mxu0 0.0
    %1571 = vmatpush1.msra.mxu0 0.0
    %1572 = vmatprep.subr.mxu0 0.0
    %1573 = vmatpush1.msra.mxu0 0.0
    %1574 = vmatprep.subr.mxu0 0.0
    %1575 = vmatpush1.msra.mxu0 0.0
    %1576 = vmatprep.subr.mxu0 0.0
    %1577 = vmatpush1.msra.mxu0 0.0
    %1578 = vmatprep.subr.mxu0 0.0
    %1579 = vmatpush1.msra.mxu0 0.0
    %1580 = vmatprep.subr.mxu0 0.0
    %1581 = vmatpush1.msra.mxu0 0.0
    %1582 = vmatprep.subr.mxu0 0.0
    %1583 = vmatpush1.msra.mxu0 0.0
    %1584 = vmatprep.mubr.f32.mxu0 0.0
    %1585 = vmatmul.mubr.f32.gmra.mrb[0].mxu0 %v1518
    %v1586 = vpop.f32.mrb[0].mxu0
    %v1587 = vadd.f32 0.0, %v1586
    %v1588 = vpop.f32.mrb[0].mxu0
    %1589 = vdwg.mxu0
    %1591 = vrot.lane.b32.xlu0 %v1587, 16
    %v1592 = vpop.permute.xlu0 %1591
    %1594 = vst.msk [vmem:[#allocation2 + $0x8] sm:$0xff] %vm920, %v1592
    %1595 = vrot.lane.b32.xlu0 %v226, 104
    %v1596 = vpop.permute.xlu0 %1595
    %1597 = vrot.lane.b32.xlu0 %v320, 104
    %v1598 = vpop.permute.xlu0 %1597
    %v1599 = vsel %vm417, %v1596, 0
    %v1601 = vsel %vm417, %v1598, 0
    %1603 = vmatprep.subr.mxu0 0.0
    %1604 = vmatpush1.xpose.msra.mxu0 %v1601
    %1605 = vmatprep.subr.mxu0 0.0
    %1606 = vmatpush1.xpose.msra.mxu0 0.0
    %1607 = vmatprep.subr.mxu0 0.0
    %1608 = vmatpush1.xpose.msra.mxu0 0.0
    %1609 = vmatprep.subr.mxu0 0.0
    %1610 = vmatpush1.xpose.msra.mxu0 0.0
    %1611 = vmatprep.subr.mxu0 0.0
    %1612 = vmatpush1.xpose.msra.mxu0 0.0
    %1613 = vmatprep.subr.mxu0 0.0
    %1614 = vmatpush1.xpose.msra.mxu0 0.0
    %1615 = vmatprep.subr.mxu0 0.0
    %1616 = vmatpush1.xpose.msra.mxu0 0.0
    %1617 = vmatprep.subr.mxu0 0.0
    %1618 = vmatpush1.xpose.msra.mxu0 0.0
    %1619 = vmatprep.subr.mxu0 0.0
    %1620 = vmatpush1.xpose.msra.mxu0 0.0
    %1621 = vmatprep.subr.mxu0 0.0
    %1622 = vmatpush1.xpose.msra.mxu0 0.0
    %1623 = vmatprep.subr.mxu0 0.0
    %1624 = vmatpush1.xpose.msra.mxu0 0.0
    %1625 = vmatprep.subr.mxu0 0.0
    %1626 = vmatpush1.xpose.msra.mxu0 0.0
    %1627 = vmatprep.subr.mxu0 0.0
    %1628 = vmatpush1.xpose.msra.mxu0 0.0
    %1629 = vmatprep.subr.mxu0 0.0
    %1630 = vmatpush1.xpose.msra.mxu0 0.0
    %1631 = vmatprep.subr.mxu0 0.0
    %1632 = vmatpush1.xpose.msra.mxu0 0.0
    %1633 = vmatprep.subr.mxu0 0.0
    %1634 = vmatpush1.xpose.msra.mxu0 0.0
    %1635 = vmatprep.subr.mxu0 0.0
    %1636 = vmatpush1.xpose.msra.mxu0 0.0
    %1637 = vmatprep.subr.mxu0 0.0
    %1638 = vmatpush1.xpose.msra.mxu0 0.0
    %1639 = vmatprep.subr.mxu0 0.0
    %1640 = vmatpush1.xpose.msra.mxu0 0.0
    %1641 = vmatprep.subr.mxu0 0.0
    %1642 = vmatpush1.xpose.msra.mxu0 0.0
    %1643 = vmatprep.subr.mxu0 0.0
    %1644 = vmatpush1.xpose.msra.mxu0 0.0
    %1645 = vmatprep.subr.mxu0 0.0
    %1646 = vmatpush1.xpose.msra.mxu0 0.0
    %1647 = vmatprep.subr.mxu0 0.0
    %1648 = vmatpush1.xpose.msra.mxu0 0.0
    %1649 = vmatprep.subr.mxu0 0.0
    %1650 = vmatpush1.xpose.msra.mxu0 0.0
    %1651 = vmatprep.subr.mxu0 0.0
    %1652 = vmatpush1.xpose.msra.mxu0 0.0
    %1653 = vmatprep.subr.mxu0 0.0
    %1654 = vmatpush1.xpose.msra.mxu0 0.0
    %1655 = vmatprep.subr.mxu0 0.0
    %1656 = vmatpush1.xpose.msra.mxu0 0.0
    %1657 = vmatprep.subr.mxu0 0.0
    %1658 = vmatpush1.xpose.msra.mxu0 0.0
    %1659 = vmatprep.subr.mxu0 0.0
    %1660 = vmatpush1.xpose.msra.mxu0 0.0
    %1661 = vmatprep.subr.mxu0 0.0
    %1662 = vmatpush1.xpose.msra.mxu0 0.0
    %1663 = vmatprep.subr.mxu0 0.0
    %1664 = vmatpush1.xpose.msra.mxu0 0.0
    %1665 = vmatprep.subr.mxu0 0.0
    %1666 = vmatpush1.xpose.msra.mxu0 0.0
    %1667 = vmatprep.mubr.f32.mxu0 0.0
    %1668 = vmatmul.mubr.f32.gmra.mrb[0].mxu0 %v1599
    %v1669 = vpop.f32.mrb[0].mxu0
    %v1670 = vadd.f32 0.0, %v1669
    %v1671 = vpop.f32.mrb[0].mxu0
    %1672 = vdwg.mxu0
    %v1673 = vsel %vm417, %v1670, -inf
    %1674 = vmax.xlane.f32.xlu0 %v1673
    %v1675 = vpop.xlane.xlu0 %1674
    %v1676 = vsub.f32 %v1670, %v1675
    %v1677 = vmul.f32 %v1676, 1.442695
    %v1678 = vpow.pop %v1677
    %v1679 = vsel %vm417, %v1678, 0.0
    %1680 = vadd.xlane.f32.xlu0 %v1679
    %v1681 = vpop.xlane.xlu0 %1680
    %v1682 = vrcp.pop %v1681
    %v1683 = vmul.f32 %v1678, %v1682
    %1684 = vrot.lane.b32.xlu0 %v414, 104
    %v1685 = vpop.permute.xlu0 %1684
    %v1688 = vsel %vm417, %v1683, 0
    %1690 = vmatprep.subr.mxu0 0.0
    %1691 = vmatpush1.msra.mxu0 %v1685
    %1692 = vmatprep.subr.mxu0 0.0
    %1693 = vmatpush1.msra.mxu0 0.0
    %1694 = vmatprep.subr.mxu0 0.0
    %1695 = vmatpush1.msra.mxu0 0.0
    %1696 = vmatprep.subr.mxu0 0.0
    %1697 = vmatpush1.msra.mxu0 0.0
    %1698 = vmatprep.subr.mxu0 0.0
    %1699 = vmatpush1.msra.mxu0 0.0
    %1700 = vmatprep.subr.mxu0 0.0
    %1701 = vmatpush1.msra.mxu0 0.0
    %1702 = vmatprep.subr.mxu0 0.0
    %1703 = vmatpush1.msra.mxu0 0.0
    %1704 = vmatprep.subr.mxu0 0.0
    %1705 = vmatpush1.msra.mxu0 0.0
    %1706 = vmatprep.subr.mxu0 0.0
    %1707 = vmatpush1.msra.mxu0 0.0
    %1708 = vmatprep.subr.mxu0 0.0
    %1709 = vmatpush1.msra.mxu0 0.0
    %1710 = vmatprep.subr.mxu0 0.0
    %1711 = vmatpush1.msra.mxu0 0.0
    %1712 = vmatprep.subr.mxu0 0.0
    %1713 = vmatpush1.msra.mxu0 0.0
    %1714 = vmatprep.subr.mxu0 0.0
    %1715 = vmatpush1.msra.mxu0 0.0
    %1716 = vmatprep.subr.mxu0 0.0
    %1717 = vmatpush1.msra.mxu0 0.0
    %1718 = vmatprep.subr.mxu0 0.0
    %1719 = vmatpush1.msra.mxu0 0.0
    %1720 = vmatprep.subr.mxu0 0.0
    %1721 = vmatpush1.msra.mxu0 0.0
    %1722 = vmatprep.subr.mxu0 0.0
    %1723 = vmatpush1.msra.mxu0 0.0
    %1724 = vmatprep.subr.mxu0 0.0
    %1725 = vmatpush1.msra.mxu0 0.0
    %1726 = vmatprep.subr.mxu0 0.0
    %1727 = vmatpush1.msra.mxu0 0.0
    %1728 = vmatprep.subr.mxu0 0.0
    %1729 = vmatpush1.msra.mxu0 0.0
    %1730 = vmatprep.subr.mxu0 0.0
    %1731 = vmatpush1.msra.mxu0 0.0
    %1732 = vmatprep.subr.mxu0 0.0
    %1733 = vmatpush1.msra.mxu0 0.0
    %1734 = vmatprep.subr.mxu0 0.0
    %1735 = vmatpush1.msra.mxu0 0.0
    %1736 = vmatprep.subr.mxu0 0.0
    %1737 = vmatpush1.msra.mxu0 0.0
    %1738 = vmatprep.subr.mxu0 0.0
    %1739 = vmatpush1.msra.mxu0 0.0
    %1740 = vmatprep.subr.mxu0 0.0
    %1741 = vmatpush1.msra.mxu0 0.0
    %1742 = vmatprep.subr.mxu0 0.0
    %1743 = vmatpush1.msra.mxu0 0.0
    %1744 = vmatprep.subr.mxu0 0.0
    %1745 = vmatpush1.msra.mxu0 0.0
    %1746 = vmatprep.subr.mxu0 0.0
    %1747 = vmatpush1.msra.mxu0 0.0
    %1748 = vmatprep.subr.mxu0 0.0
    %1749 = vmatpush1.msra.mxu0 0.0
    %1750 = vmatprep.subr.mxu0 0.0
    %1751 = vmatpush1.msra.mxu0 0.0
    %1752 = vmatprep.subr.mxu0 0.0
    %1753 = vmatpush1.msra.mxu0 0.0
    %1754 = vmatprep.mubr.f32.mxu0 0.0
    %1755 = vmatmul.mubr.f32.gmra.mrb[0].mxu0 %v1688
    %v1756 = vpop.f32.mrb[0].mxu0
    %v1757 = vadd.f32 0.0, %v1756
    %v1758 = vpop.f32.mrb[0].mxu0
    %1759 = vdwg.mxu0
    %1761 = vrot.lane.b32.xlu0 %v1757, 24
    %v1762 = vpop.permute.xlu0 %1761
    %1764 = vst.msk [vmem:[#allocation2 + $0x8] sm:$0xff] %vm1091, %v1762
    %v1765 = vld [vmem:[#allocation2] sm:$0xff]
    %v1766 = vld [vmem:[#allocation2 + $0x8] sm:$0xff]
    %v1767 = vld [vmem:[#allocation14] sm:$0xff]
    %v1768 = vld [vmem:[#allocation14 + $0x8] sm:$0xff]
    %v1769 = vld [vmem:[#allocation14 + $0x10] sm:$0xff]
    %v1770 = vld [vmem:[#allocation14 + $0x18] sm:$0xff]
    %v1771 = vld [vmem:[%s10] sm:$0x1]
    %v1773 = vlaneseq
    %v1774 = vshrl.u32 %v1773, 7
    %v1775 = vsub.s32 0, %v1774
    %v1776 = vrot.slane %v1771, %v1775
    %v1779 = vsel %vm147, %v1765, 0
    %v1782 = vsel %vm147, %v1766, 0
    %1784 = vmatprep.subr.mxu0 0.0
    %1785 = vmatpush1.msra.mxu0 %v1767
    %1786 = vmatprep.subr.mxu0 0.0
    %1787 = vmatpush1.msra.mxu0 %v1768
    %1788 = vmatprep.subr.mxu0 0.0
    %1789 = vmatpush1.msra.mxu0 %v1769
    %1790 = vmatprep.subr.mxu0 0.0
    %1791 = vmatpush1.msra.mxu0 %v1770
    %1792 = vmatprep.subr.mxu0 0.0
    %1793 = vmatpush1.msra.mxu0 0.0
    %1794 = vmatprep.subr.mxu0 0.0
    %1795 = vmatpush1.msra.mxu0 0.0
    %1796 = vmatprep.subr.mxu0 0.0
    %1797 = vmatpush1.msra.mxu0 0.0
    %1798 = vmatprep.subr.mxu0 0.0
    %1799 = vmatpush1.msra.mxu0 0.0
    %1800 = vmatprep.subr.mxu0 0.0
    %1801 = vmatpush1.msra.mxu0 0.0
    %1802 = vmatprep.subr.mxu0 0.0
    %1803 = vmatpush1.msra.mxu0 0.0
    %1804 = vmatprep.subr.mxu0 0.0
    %1805 = vmatpush1.msra.mxu0 0.0
    %1806 = vmatprep.subr.mxu0 0.0
    %1807 = vmatpush1.msra.mxu0 0.0
    %1808 = vmatprep.subr.mxu0 0.0
    %1809 = vmatpush1.msra.mxu0 0.0
    %1810 = vmatprep.subr.mxu0 0.0
    %1811 = vmatpush1.msra.mxu0 0.0
    %1812 = vmatprep.subr.mxu0 0.0
    %1813 = vmatpush1.msra.mxu0 0.0
    %1814 = vmatprep.subr.mxu0 0.0
    %1815 = vmatpush1.msra.mxu0 0.0
    %1816 = vmatprep.subr.mxu0 0.0
    %1817 = vmatpush1.msra.mxu0 0.0
    %1818 = vmatprep.subr.mxu0 0.0
    %1819 = vmatpush1.msra.mxu0 0.0
    %1820 = vmatprep.subr.mxu0 0.0
    %1821 = vmatpush1.msra.mxu0 0.0
    %1822 = vmatprep.subr.mxu0 0.0
    %1823 = vmatpush1.msra.mxu0 0.0
    %1824 = vmatprep.subr.mxu0 0.0
    %1825 = vmatpush1.msra.mxu0 0.0
    %1826 = vmatprep.subr.mxu0 0.0
    %1827 = vmatpush1.msra.mxu0 0.0
    %1828 = vmatprep.subr.mxu0 0.0
    %1829 = vmatpush1.msra.mxu0 0.0
    %1830 = vmatprep.subr.mxu0 0.0
    %1831 = vmatpush1.msra.mxu0 0.0
    %1832 = vmatprep.subr.mxu0 0.0
    %1833 = vmatpush1.msra.mxu0 0.0
    %1834 = vmatprep.subr.mxu0 0.0
    %1835 = vmatpush1.msra.mxu0 0.0
    %1836 = vmatprep.subr.mxu0 0.0
    %1837 = vmatpush1.msra.mxu0 0.0
    %1838 = vmatprep.subr.mxu0 0.0
    %1839 = vmatpush1.msra.mxu0 0.0
    %1840 = vmatprep.subr.mxu0 0.0
    %1841 = vmatpush1.msra.mxu0 0.0
    %1842 = vmatprep.subr.mxu0 0.0
    %1843 = vmatpush1.msra.mxu0 0.0
    %1844 = vmatprep.subr.mxu0 0.0
    %1845 = vmatpush1.msra.mxu0 0.0
    %1846 = vmatprep.subr.mxu0 0.0
    %1847 = vmatpush1.msra.mxu0 0.0
    %1848 = vmatprep.mubr.f32.mxu0 0.0
    %1849 = vmatmul.mubr.f32.gmra.mrb[0].mxu0 %v1779
    %v1850 = vpop.f32.mrb[0].mxu0
    %v1851 = vadd.f32 %v1776, %v1850
    %v1852 = vpop.f32.mrb[0].mxu0
    %1853 = vmatprep.mubr.f32.mxu0 0.0
    %1854 = vmatmul.mubr.f32.gmra.mrb[0].mxu0 %v1782
    %v1855 = vpop.f32.mrb[0].mxu0
    %v1856 = vadd.f32 %v1776, %v1855
    %v1857 = vpop.f32.mrb[0].mxu0
    %1858 = vdwg.mxu0
    %1859 = vst.msk [vmem:[#allocation15] sm:$0xff] %vm147, %v1851
    %1860 = vst.msk [vmem:[#allocation15 + $0x8] sm:$0xff] %vm147, %v1856
    // Predicated region
    $region74: #{tpu_custom_call.1} parent=1 // pred_check
      _
    $region75: #{tpu_custom_call.1} parent=1 // pred_check_branch
      %1862 = sbr.rel (0) target = $region77
    $region76: #{tpu_custom_call.1} parent=1 // pred_region
      %s1864 = ssub.s32 256, 256
      %1865 = vsyncadd [#allocation5], %s1864
      %s1866 = sshll.u32 [#allocation15], 4
      %s1867 = int_to_ptr.vmem [resolvable:$true] %s1866
      %1872 = dma.vmem_to_hbm [thread:$0]  %s1867, 256, %s11, [#allocation5], 128, 128, 8
    $region77: #{tpu_custom_call.1} parent=1 // pred_fallthru
      _
    // Predicated region
    $region78: #{tpu_custom_call.1} parent=1 // pred_check
      _
    $region79: #{tpu_custom_call.1} parent=1 // pred_check_branch
      %1874 = sbr.rel (0) target = $region81
    $region80: #{tpu_custom_call.1} parent=1 // pred_region
      %1875 = dma.done [#allocation5], 256
    $region81: #{tpu_custom_call.1} parent=1 // pred_fallthru
      _
    %1876 = vsyncpa [#allocation4], 1
    %1877 = vsyncpa [#allocation7], 1
    %1878 = vsyncpa [#allocation10], 1
    %1879 = vsyncpa [#allocation13], 1
    %1880 = vsyncpa [#allocation5], 1

</llo_original>
